<compile_context>
chip_gen: v6e
topology: v6e:2x2x1
jax: 0.10.0
libtpu: 0.0.40
codegen_flags: <defaults>
</compile_context>

<pallas_src>
import jax
import jax.numpy as jnp
from jax.experimental import pallas as pl
from jax.experimental.pallas import tpu as pltpu


# ----------------------------------------------------------------------------
# Helpers
# ----------------------------------------------------------------------------
def _round_up(x, m):
    return (x + m - 1) // m * m


def _sublane(dtype):
    # Sublane packing requirement for the second-to-last block dim.
    return {4: 8, 2: 16, 1: 32}.get(jnp.dtype(dtype).itemsize, 8)


def _vmem_capacity_bytes():
    try:
        return int(pltpu.get_tpu_info().vmem_capacity_bytes)
    except Exception:
        return 64 * 1024 * 1024          # conservative (v7x per-TC VMEM)


def _default_tm_target():
    # Row-tile target ~ compute/HBM-bandwidth ridge per generation:
    #   v5e: ~197 TF/s / 0.82 TB/s  -> ~240 FLOP/B  -> tm ~ 256
    #   v6e: ~918 TF/s / 1.35 TB/s  -> ~680 FLOP/B  -> tm ~ 1024
    #   v7x: capped by 64 MiB VMEM  ->                tm ~ 512 (also default)
    try:
        kind = jax.devices()[0].device_kind.lower()
    except Exception:
        return 512
    if "v5" in kind:
        return 256
    if "v6" in kind:
        return 1024
    return 512


def _vmem_bytes(tm, tf, D, x_bytes, out_bytes, w_bytes, use_scratch):
    # Rough VMEM footprint with default double-buffering on every BlockSpec.
    total = 2 * tm * D * x_bytes               # x tile
    total += 2 * tm * D * out_bytes            # output tile
    if use_scratch:
        total += tm * D * 4                    # f32 accumulator scratch
    total += 2 * D * tf * w_bytes              # W1 tile
    total += 2 * tf * D * w_bytes              # W2 tile
    total += 2 * 8 * _round_up(tf, 128) * 4    # b1 (tile-padded)
    total += 2 * 8 * _round_up(D, 128) * 4     # b2 (tile-padded)
    return total


def _choose_tiles(tm_target, d_ff_pad, D, x_bytes, out_bytes, w_bytes,
                  use_scratch, budget, sub, tf_target=None):
    cands = [c for c in range(128, d_ff_pad + 1, 128) if d_ff_pad % c == 0]
    tm = max(sub, _round_up(tm_target, sub))

    def fits(tm_, tf_):
        return _vmem_bytes(tm_, tf_, D, x_bytes, out_bytes, w_bytes,
                           use_scratch) <= budget

    if tf_target is not None:
        tf = max([c for c in cands if c <= tf_target] or [cands[0]])
    elif fits(tm, d_ff_pad):
        # Full weights fit -> pin them resident: their block index is constant
        # across the whole grid, so they are DMA'd exactly once.
        tf = d_ff_pad
    else:
        tf = max([c for c in cands if c <= 512] or [cands[0]])

    # Shrink tf first (does not hurt arithmetic intensity), then halve tm.
    while not fits(tm, tf):
        smaller = [c for c in cands if c < tf]
        if smaller:
            tf = smaller[-1]
        elif tm > sub:
            tm = max(sub, _round_up(tm // 2, sub))
        else:
            break
    return tm, tf


# ----------------------------------------------------------------------------
# Kernels
# ----------------------------------------------------------------------------
def _ffn_kernel_direct(x_ref, w1_ref, b1_ref, w2_ref, b2_ref, o_ref):
    # f32 output: its block index is invariant along grid axis 1, so the block
    # stays VMEM-resident across the d_ff reduction -> accumulate in place.
    j = pl.program_id(1)

    h = jnp.dot(x_ref[...].astype(w1_ref.dtype), w1_ref[...],
                preferred_element_type=jnp.float32)
    h = jnp.maximum(h + b1_ref[...], 0.0)
    contrib = jnp.dot(h.astype(w2_ref.dtype), w2_ref[...],
                      preferred_element_type=jnp.float32)

    @pl.when(j == 0)
    def _():
        o_ref[...] = contrib + b2_ref[...]     # seed with b2, no zero-init pass

    @pl.when(j != 0)
    def _():
        o_ref[...] += contrib


def _ffn_kernel_acc(x_ref, w1_ref, b1_ref, w2_ref, b2_ref, o_ref, acc_ref):
    # Non-f32 output: accumulate in an f32 VMEM scratch, cast on the last step.
    j = pl.program_id(1)

    h = jnp.dot(x_ref[...].astype(w1_ref.dtype), w1_ref[...],
                preferred_element_type=jnp.float32)
    h = jnp.maximum(h + b1_ref[...], 0.0)
    contrib = jnp.dot(h.astype(w2_ref.dtype), w2_ref[...],
                      preferred_element_type=jnp.float32)

    @pl.when(j == 0)
    def _():
        acc_ref[...] = contrib + b2_ref[...]

    @pl.when(j != 0)
    def _():
        acc_ref[...] += contrib

    @pl.when(j == pl.num_programs(1) - 1)
    def _():
        o_ref[...] = acc_ref[...].astype(o_ref.dtype)


# ----------------------------------------------------------------------------
# Wrapper
# ----------------------------------------------------------------------------
def feed_forward(x, w1, b1, w2, b2, *, compute_dtype=jnp.bfloat16,
                 tm_target=None, tf_target=None):
    """x: (batch, seq, d_model) -> (batch, seq, d_model).

    w1: (d_model, d_ff), w2: (d_ff, d_model) — already [in, out] layout and
    ideally already stored in `compute_dtype` (no per-call cast then).
    """
    B, S, D = x.shape
    d_ff = w1.shape[1]
    M = B * S
    out_dtype = x.dtype

    x_bytes = jnp.dtype(x.dtype).itemsize
    out_bytes = jnp.dtype(out_dtype).itemsize
    w_bytes = jnp.dtype(compute_dtype).itemsize
    sub = max(_sublane(x.dtype), _sublane(out_dtype))

    # f32 outputs accumulate directly into the output block -> no scratch.
    use_scratch = out_dtype != jnp.float32

    # VMEM budget from the actual chip (leaves headroom for compiler scratch).
    vmem_cap = _vmem_capacity_bytes()
    vmem_limit = int(vmem_cap * 0.85)
    budget = int(vmem_limit * 0.85)

    if tm_target is None:
        tm_target = _default_tm_target()

    d_ff_pad = _round_up(d_ff, 128)

    tm_fit, tf = _choose_tiles(tm_target, d_ff_pad, D, x_bytes, out_bytes,
                               w_bytes, use_scratch, budget, sub, tf_target)

    # Even split of M over row tiles -> padding waste < one sublane group/tile.
    n_i = -(-M // tm_fit)
    tm = max(sub, _round_up(-(-M // n_i), sub))
    m_pad = n_i * tm

    # ---- operand prep (no weight casts when already in compute_dtype) ------
    x2d = x.reshape(M, D)
    if m_pad != M:
        x2d = jnp.pad(x2d, ((0, m_pad - M), (0, 0)))

    w1c = w1 if w1.dtype == compute_dtype else w1.astype(compute_dtype)
    w2c = w2 if w2.dtype == compute_dtype else w2.astype(compute_dtype)
    b1_2d = b1.reshape(1, d_ff).astype(jnp.float32)
    b2_2d = b2.reshape(1, D).astype(jnp.float32)
    if d_ff_pad != d_ff:
        # Zero-padding d_ff is numerically a no-op (relu(0)*0 contributes 0).
        w1c = jnp.pad(w1c, ((0, 0), (0, d_ff_pad - d_ff)))
        w2c = jnp.pad(w2c, ((0, d_ff_pad - d_ff), (0, 0)))
        b1_2d = jnp.pad(b1_2d, ((0, 0), (0, d_ff_pad - d_ff)))

    grid = (m_pad // tm, d_ff_pad // tf)

    kernel = _ffn_kernel_acc if use_scratch else _ffn_kernel_direct
    scratch_shapes = ([pltpu.VMEM((tm, D), jnp.float32)] if use_scratch
                      else [])

    out2d = pl.pallas_call(
        kernel,
        out_shape=jax.ShapeDtypeStruct((m_pad, D), out_dtype),
        grid_spec=pltpu.PrefetchScalarGridSpec(
            num_scalar_prefetch=0,
            grid=grid,
            in_specs=[
                pl.BlockSpec((tm, D), lambda i, j: (i, 0)),    # x row tile
                pl.BlockSpec((D, tf), lambda i, j: (0, j)),    # W1 column tile
                pl.BlockSpec((1, tf), lambda i, j: (0, j)),    # b1 tile
                pl.BlockSpec((tf, D), lambda i, j: (j, 0)),    # W2 row tile
                pl.BlockSpec((1, D), lambda i, j: (0, 0)),     # b2
            ],
            out_specs=pl.BlockSpec((tm, D), lambda i, j: (i, 0)),
            scratch_shapes=scratch_shapes,
        ),
        compiler_params=pltpu.CompilerParams(
            dimension_semantics=("parallel", "arbitrary"),
            vmem_limit_bytes=vmem_limit,
        ),
    )(x2d, w1c, b1_2d, w2c, b2_2d)

    if m_pad != M:
        out2d = out2d[:M]
    return out2d.reshape(B, S, D)


def init_params(key, d_model, d_ff, *, param_dtype=jnp.bfloat16):
    """nn.Linear-style init (uniform(-1/sqrt(fan_in), +)); weights are cast to
    the matmul dtype ONCE here so the kernel wrapper never re-casts them."""
    k1, k2, k3, k4 = jax.random.split(key, 4)
    bound1 = 1.0 / (d_model ** 0.5)
    bound2 = 1.0 / (d_ff ** 0.5)
    # stored as [in, out] so the kernel does x @ W
    w1 = jax.random.uniform(k1, (d_model, d_ff), jnp.float32,
                            -bound1, bound1).astype(param_dtype)
    b1 = jax.random.uniform(k2, (d_ff,), jnp.float32, -bound1, bound1)
    w2 = jax.random.uniform(k3, (d_ff, d_model), jnp.float32,
                            -bound2, bound2).astype(param_dtype)
    b2 = jax.random.uniform(k4, (d_model,), jnp.float32, -bound2, bound2)
    return w1, b1, w2, b2


if __name__ == "__main__":
    batch, seq, d_model, d_ff = 4, 16, 256, 1024

    key = jax.random.PRNGKey(0)
    kx, kp = jax.random.split(key)
    x = jax.random.normal(kx, (batch, seq, d_model), jnp.float32)
    w1, b1, w2, b2 = init_params(kp, d_model, d_ff)      # weights bf16

    out = jax.block_until_ready(feed_forward(x, w1, b1, w2, b2))

    # Reference in plain JAX (same math as the PyTorch module), f32 compute on
    # the bf16-stored weights.
    w1f, w2f = w1.astype(jnp.float32), w2.astype(jnp.float32)
    ref = jnp.maximum(x @ w1f + b1, 0.0) @ w2f + b2
    assert out.shape == (batch, seq, d_model)
    assert out.dtype == x.dtype
    assert jnp.allclose(out, ref, atol=2e-2, rtol=2e-2), float(
        jnp.max(jnp.abs(out - ref)))

    # Ragged-row check: M = 2*7 = 14 is not a tile multiple -> exercises padding.
    x_small = jax.random.normal(jax.random.PRNGKey(1), (2, 7, d_model),
                                jnp.float32)
    out_small = jax.block_until_ready(feed_forward(x_small, w1, b1, w2, b2))
    ref_small = jnp.maximum(x_small @ w1f + b1, 0.0) @ w2f + b2
    assert out_small.shape == (2, 7, d_model)
    assert jnp.allclose(out_small, ref_small, atol=2e-2, rtol=2e-2)

    # bf16 activations -> exercises the scratch-accumulator (non-f32 out) path.
    x_bf = x.astype(jnp.bfloat16)
    out_bf = jax.block_until_ready(feed_forward(x_bf, w1, b1, w2, b2))
    ref_bf = jnp.maximum(x_bf.astype(jnp.float32) @ w1f + b1, 0.0) @ w2f + b2
    assert out_bf.dtype == jnp.bfloat16
    assert jnp.allclose(out_bf.astype(jnp.float32), ref_bf,
                        atol=1e-1, rtol=1e-1)

    print("KERNEL_OK")
</pallas_src>

<mosaic_0001>
module attributes {stable_mosaic.version = 11 : i64} {
  func.func @_ffn_kernel_direct(%arg0: i32, %arg1: i32, %arg2: memref<64x256xf32, #tpu.memory_space<vmem>>, %arg3: memref<256x1024xbf16, #tpu.memory_space<vmem>>, %arg4: memref<1x1024xf32, #tpu.memory_space<vmem>>, %arg5: memref<1024x256xbf16, #tpu.memory_space<vmem>>, %arg6: memref<1x256xf32, #tpu.memory_space<vmem>>, %arg7: memref<64x256xf32, #tpu.memory_space<vmem>>) attributes {dimension_semantics = [#tpu.dimension_semantics<parallel>, #tpu.dimension_semantics<arbitrary>], iteration_bounds = array<i64: 1, 1>, scalar_prefetch = 0 : i64, scratch_operands = 0 : i64, tpu.core_type = #tpu.core_type<tc>, window_params = [{transform_indices = @transform_0, window_bounds = array<i64: 64, 256>}, {transform_indices = @transform_1, window_bounds = array<i64: 256, 1024>}, {transform_indices = @transform_2, window_bounds = array<i64: 1, 1024>}, {transform_indices = @transform_3, window_bounds = array<i64: 1024, 256>}, {pipeline_mode = #tpu.pipeline_mode<synchronous>, transform_indices = @transform_4, window_bounds = array<i64: 1, 256>}, {transform_indices = @transform_5, window_bounds = array<i64: 64, 256>}]} {
    %c0 = arith.constant 0 : index
    %c0_0 = arith.constant 0 : index
    %0 = vector.load %arg2[%c0, %c0_0] : memref<64x256xf32, #tpu.memory_space<vmem>>, vector<64x256xf32>
    %1 = arith.truncf %0 : vector<64x256xf32> to vector<64x256xbf16>
    %c0_1 = arith.constant 0 : index
    %c0_2 = arith.constant 0 : index
    %2 = vector.load %arg3[%c0_1, %c0_2] : memref<256x1024xbf16, #tpu.memory_space<vmem>>, vector<256x1024xbf16>
    %cst = arith.constant dense<0.000000e+00> : vector<64x1024xf32>
    %3 = tpu.matmul %1, %2, %cst {dimension_numbers = #tpu.dot_dimension_numbers<[1], [0], [0], [1], [0, 0, 1, 1], [], []>} : vector<64x256xbf16>, vector<256x1024xbf16>, vector<64x1024xf32> -> vector<64x1024xf32>
    %c0_3 = arith.constant 0 : index
    %c0_4 = arith.constant 0 : index
    %4 = vector.load %arg4[%c0_3, %c0_4] : memref<1x1024xf32, #tpu.memory_space<vmem>>, vector<1x1024xf32>
    %5 = vector.broadcast %4 : vector<1x1024xf32> to vector<64x1024xf32>
    %6 = arith.addf %3, %5 : vector<64x1024xf32>
    %cst_5 = arith.constant 0.000000e+00 : f32
    %7 = vector.broadcast %cst_5 : f32 to vector<64x1024xf32>
    %8 = arith.maximumf %6, %7 : vector<64x1024xf32>
    %9 = arith.truncf %8 : vector<64x1024xf32> to vector<64x1024xbf16>
    %c0_6 = arith.constant 0 : index
    %c0_7 = arith.constant 0 : index
    %10 = vector.load %arg5[%c0_6, %c0_7] : memref<1024x256xbf16, #tpu.memory_space<vmem>>, vector<1024x256xbf16>
    %cst_8 = arith.constant dense<0.000000e+00> : vector<64x256xf32>
    %11 = tpu.matmul %9, %10, %cst_8 {dimension_numbers = #tpu.dot_dimension_numbers<[1], [0], [0], [1], [0, 0, 1, 1], [], []>} : vector<64x1024xbf16>, vector<1024x256xbf16>, vector<64x256xf32> -> vector<64x256xf32>
    %c0_i32 = arith.constant 0 : i32
    %12 = arith.cmpi eq, %arg1, %c0_i32 : i32
    %13 = arith.extui %12 : i1 to i32
    %c0_i32_9 = arith.constant 0 : i32
    %14 = arith.cmpi ne, %13, %c0_i32_9 : i32
    scf.if %14 {
      %c0_12 = arith.constant 0 : index
      %c0_13 = arith.constant 0 : index
      %18 = vector.load %arg6[%c0_12, %c0_13] : memref<1x256xf32, #tpu.memory_space<vmem>>, vector<1x256xf32>
      %19 = vector.broadcast %18 : vector<1x256xf32> to vector<64x256xf32>
      %20 = arith.addf %11, %19 : vector<64x256xf32>
      %c0_14 = arith.constant 0 : index
      %c0_15 = arith.constant 0 : index
      %21 = vector.load %arg7[%c0_14, %c0_15] : memref<64x256xf32, #tpu.memory_space<vmem>>, vector<64x256xf32>
      tpu.vector_store %arg7[%c0_14, %c0_15], %20 {strides = array<i32>} : memref<64x256xf32, #tpu.memory_space<vmem>>, vector<64x256xf32>,
    } else {
    }
    %c0_i32_10 = arith.constant 0 : i32
    %15 = arith.cmpi ne, %arg1, %c0_i32_10 : i32
    %16 = arith.extui %15 : i1 to i32
    %c0_i32_11 = arith.constant 0 : i32
    %17 = arith.cmpi ne, %16, %c0_i32_11 : i32
    scf.if %17 {
      %c0_12 = arith.constant 0 : index
      %c0_13 = arith.constant 0 : index
      %18 = vector.load %arg7[%c0_12, %c0_13] : memref<64x256xf32, #tpu.memory_space<vmem>>, vector<64x256xf32>
      %19 = arith.addf %18, %11 : vector<64x256xf32>
      %c0_14 = arith.constant 0 : index
      %c0_15 = arith.constant 0 : index
      %20 = vector.load %arg7[%c0_14, %c0_15] : memref<64x256xf32, #tpu.memory_space<vmem>>, vector<64x256xf32>
      tpu.vector_store %arg7[%c0_14, %c0_15], %19 {strides = array<i32>} : memref<64x256xf32, #tpu.memory_space<vmem>>, vector<64x256xf32>,
    } else {
    }
    return
  }
  func.func @transform_0(%arg0: i32, %arg1: i32) -> (i32, i32) {
    %c0_i32 = arith.constant 0 : i32
    %c0_i32_0 = arith.constant 0 : i32
    return %arg0, %c0_i32 : i32, i32
  }
  func.func @transform_1(%arg0: i32, %arg1: i32) -> (i32, i32) {
    %c0_i32 = arith.constant 0 : i32
    %c0_i32_0 = arith.constant 0 : i32
    return %c0_i32, %arg1 : i32, i32
  }
  func.func @transform_2(%arg0: i32, %arg1: i32) -> (i32, i32) {
    %c0_i32 = arith.constant 0 : i32
    %c0_i32_0 = arith.constant 0 : i32
    return %c0_i32, %arg1 : i32, i32
  }
  func.func @transform_3(%arg0: i32, %arg1: i32) -> (i32, i32) {
    %c0_i32 = arith.constant 0 : i32
    %c0_i32_0 = arith.constant 0 : i32
    return %arg1, %c0_i32 : i32, i32
  }
  func.func @transform_4(%arg0: i32, %arg1: i32) -> (i32, i32) {
    %c0_i32 = arith.constant 0 : i32
    %c0_i32_0 = arith.constant 0 : i32
    %c0_i32_1 = arith.constant 0 : i32
    return %c0_i32, %c0_i32_0 : i32, i32
  }
  func.func @transform_5(%arg0: i32, %arg1: i32) -> (i32, i32) {
    %c0_i32 = arith.constant 0 : i32
    %c0_i32_0 = arith.constant 0 : i32
    return %arg0, %c0_i32 : i32, i32
  }
}

</mosaic_0001>

<llo_original>
// kernel: tpu_custom_call.1
$region0: #{tpu_custom_call.1}
  #allocation0 [shape = 'u32[]', space=smem, size = 0x4, offset = 0x4, fixed_abs, tag = 'smem constant byte address 0x4 - core index']
  #allocation1 [shape = 'u32[144,128]{1,0:T(1,128)}', space=vmem, size = 0x12000, scoped, tag = 'internal scratch']
  %s0 = inlined_call_operand.hbm [shape: f32[64,256], index: 0, kind: input, shape index: {}]
  %s1 = inlined_call_operand.hbm [shape: bf16[256,1024], index: 1, kind: input, shape index: {}]
  %s2 = inlined_call_operand.hbm [shape: f32[1,1024], index: 2, kind: input, shape index: {}]
  %s3 = inlined_call_operand.hbm [shape: bf16[1024,256], index: 3, kind: input, shape index: {}]
  %s4 = inlined_call_operand.vmem [shape: f32[1,256], index: 4, kind: input, shape index: {}]
  %s5 = inlined_call_operand.hbm [shape: f32[64,256], index: 5, kind: output, shape index: {}]
  %s6 = sld [smem:[#allocation0]]
  $region54: #{tpu_custom_call.1} parent=0
    _
  %s8 = ssub.s32 1, %s6
  %s9 = scalar_select 0, %s8, %s6
  $region1: #{tpu_custom_call.1} parent=0
    #allocation2 [shape = 'u8[65536]{0}', space=vmem, size = 0x10000, scoped, tag = 'input window, operand 0, single buffered']
    #allocation3 [shape = 's32[1]{0}', space=sflag, size = 0x4, scoped, tag = 'scoped memory for tpu_custom_call.1']
    #allocation4 [shape = 's32[1]{0}', space=sflag, size = 0x4, scoped, tag = 'scoped memory for tpu_custom_call.1']
    #allocation5 [shape = 'u8[524288]{0}', space=vmem, size = 0x80000, scoped, tag = 'input window, operand 1, single buffered']
    #allocation6 [shape = 's32[1]{0}', space=sflag, size = 0x4, scoped, tag = 'scoped memory for tpu_custom_call.1']
    #allocation7 [shape = 'u8[4096]{0}', space=vmem, size = 0x1000, scoped, tag = 'input window, operand 2, single buffered']
    #allocation8 [shape = 'u8[524288]{0}', space=vmem, size = 0x80000, scoped, tag = 'input window, operand 3, single buffered']
    #allocation9 [shape = 's32[1]{0}', space=sflag, size = 0x4, scoped, tag = 'scoped memory for tpu_custom_call.1']
    #allocation10 [shape = 'u8[65536]{0}', space=vmem, size = 0x10000, scoped, tag = 'output window, operand 0, single buffered']
    %10 = vsyncpa [#allocation3], 0
    %11 = vsyncpa [#allocation6], 0
    %12 = vsyncpa [#allocation9], 0
    %13 = vsyncpa [#allocation4], 0
    // Predicated region
    $region2: #{tpu_custom_call.1} parent=1 // pred_check
      _
    $region3: #{tpu_custom_call.1} parent=1 // pred_check_branch
      %15 = sbr.rel (0) target = $region5
    $region4: #{tpu_custom_call.1} parent=1 // pred_region
      %s17 = ssub.s32 2048, 2048
      %18 = vsyncadd [#allocation3], %s17
      %s19 = sshll.u32 [#allocation2], 4
      %s20 = int_to_ptr.vmem [resolvable:$true] %s19
      %25 = dma.hbm_to_vmem [thread:$0]  %s0, 2048, %s20, [#allocation3], 256, 256, 16
    $region5: #{tpu_custom_call.1} parent=1 // pred_fallthru
      _
    // Predicated region
    $region6: #{tpu_custom_call.1} parent=1 // pred_check
      _
    $region7: #{tpu_custom_call.1} parent=1 // pred_check_branch
      %27 = sbr.rel (0) target = $region9
    $region8: #{tpu_custom_call.1} parent=1 // pred_region
      %s29 = ssub.s32 16384, 16384
      %30 = vsyncadd [#allocation6], %s29
      %s31 = sshll.u32 [#allocation5], 4
      %s32 = int_to_ptr.vmem [resolvable:$true] %s31
      %37 = dma.hbm_to_vmem [thread:$0]  %s1, 16384, %s32, [#allocation6], 512, 512, 32
    $region9: #{tpu_custom_call.1} parent=1 // pred_fallthru
      _
    // Predicated region
    $region10: #{tpu_custom_call.1} parent=1 // pred_check
      _
    $region11: #{tpu_custom_call.1} parent=1 // pred_check_branch
      %39 = sbr.rel (0) target = $region13
    $region12: #{tpu_custom_call.1} parent=1 // pred_region
      %s41 = ssub.s32 128, 128
      %42 = vsyncadd [#allocation6], %s41
      %s44 = sshll.u32 [#allocation7], 4
      %s45 = int_to_ptr.vmem [resolvable:$true] %s44
      %47 = dma.hbm_to_vmem [thread:$0]  %s2, 128, %s45, [#allocation6]
    $region13: #{tpu_custom_call.1} parent=1 // pred_fallthru
      _
    // Predicated region
    $region14: #{tpu_custom_call.1} parent=1 // pred_check
      _
    $region15: #{tpu_custom_call.1} parent=1 // pred_check_branch
      %49 = sbr.rel (0) target = $region17
    $region16: #{tpu_custom_call.1} parent=1 // pred_region
      %s51 = ssub.s32 16384, 16384
      %52 = vsyncadd [#allocation9], %s51
      %s53 = sshll.u32 [#allocation8], 4
      %s54 = int_to_ptr.vmem [resolvable:$true] %s53
      %59 = dma.hbm_to_vmem [thread:$0]  %s3, 16384, %s54, [#allocation9], 128, 128, 8
    $region17: #{tpu_custom_call.1} parent=1 // pred_fallthru
      _
    // Predicated region
    $region18: #{tpu_custom_call.1} parent=1 // pred_check
      _
    $region19: #{tpu_custom_call.1} parent=1 // pred_check_branch
      %61 = sbr.rel (0) target = $region21
    $region20: #{tpu_custom_call.1} parent=1 // pred_region
      _
    $region21: #{tpu_custom_call.1} parent=1 // pred_fallthru
      _
    // Predicated region
    $region22: #{tpu_custom_call.1} parent=1 // pred_check
      _
    $region23: #{tpu_custom_call.1} parent=1 // pred_check_branch
      %63 = sbr.rel (0) target = $region25
    $region24: #{tpu_custom_call.1} parent=1 // pred_region
      %64 = dma.done [#allocation3], 2048
    $region25: #{tpu_custom_call.1} parent=1 // pred_fallthru
      _
    // Predicated region
    $region26: #{tpu_custom_call.1} parent=1 // pred_check
      _
    $region27: #{tpu_custom_call.1} parent=1 // pred_check_branch
      %66 = sbr.rel (0) target = $region29
    $region28: #{tpu_custom_call.1} parent=1 // pred_region
      %67 = dma.done [#allocation6], 16384
    $region29: #{tpu_custom_call.1} parent=1 // pred_fallthru
      _
    // Predicated region
    $region30: #{tpu_custom_call.1} parent=1 // pred_check
      _
    $region31: #{tpu_custom_call.1} parent=1 // pred_check_branch
      %69 = sbr.rel (0) target = $region33
    $region32: #{tpu_custom_call.1} parent=1 // pred_region
      %70 = dma.done [#allocation6], 128
    $region33: #{tpu_custom_call.1} parent=1 // pred_fallthru
      _
    // Predicated region
    $region34: #{tpu_custom_call.1} parent=1 // pred_check
      _
    $region35: #{tpu_custom_call.1} parent=1 // pred_check_branch
      %72 = sbr.rel (0) target = $region37
    $region36: #{tpu_custom_call.1} parent=1 // pred_region
      %73 = dma.done [#allocation9], 16384
    $region37: #{tpu_custom_call.1} parent=1 // pred_fallthru
      _
    %v74 = vld [vmem:[#allocation2] sm:$0xff]
    %v75 = vld [vmem:[#allocation2 + $0x8] sm:$0xff]
    %v76 = vld [vmem:[#allocation2 + $0x10] sm:$0xff]
    %v77 = vld [vmem:[#allocation2 + $0x18] sm:$0xff]
    %v78 = vld [vmem:[#allocation2 + $0x20] sm:$0xff]
    %v79 = vld [vmem:[#allocation2 + $0x28] sm:$0xff]
    %v80 = vld [vmem:[#allocation2 + $0x30] sm:$0xff]
    %v81 = vld [vmem:[#allocation2 + $0x38] sm:$0xff]
    %v82 = vld [vmem:[#allocation2 + $0x40] sm:$0xff]
    %v83 = vld [vmem:[#allocation2 + $0x48] sm:$0xff]
    %v84 = vld [vmem:[#allocation2 + $0x50] sm:$0xff]
    %v85 = vld [vmem:[#allocation2 + $0x58] sm:$0xff]
    %v86 = vld [vmem:[#allocation2 + $0x60] sm:$0xff]
    %v87 = vld [vmem:[#allocation2 + $0x68] sm:$0xff]
    %v88 = vld [vmem:[#allocation2 + $0x70] sm:$0xff]
    %v89 = vld [vmem:[#allocation2 + $0x78] sm:$0xff]
    %v90 = vpack.c.bf16 %v76, %v74
    %v91 = vpack.c.bf16 %v77, %v75
    %v92 = vpack.c.bf16 %v80, %v78
    %v93 = vpack.c.bf16 %v81, %v79
    %v94 = vpack.c.bf16 %v84, %v82
    %v95 = vpack.c.bf16 %v85, %v83
    %v96 = vpack.c.bf16 %v88, %v86
    %v97 = vpack.c.bf16 %v89, %v87
    %v98 = vld [vmem:[#allocation5] sm:$0xff]
    %v99 = vld [vmem:[#allocation5 + $0x8] sm:$0xff]
    %v100 = vld [vmem:[#allocation5 + $0x10] sm:$0xff]
    %v101 = vld [vmem:[#allocation5 + $0x18] sm:$0xff]
    %v102 = vld [vmem:[#allocation5 + $0x20] sm:$0xff]
    %v103 = vld [vmem:[#allocation5 + $0x28] sm:$0xff]
    %v104 = vld [vmem:[#allocation5 + $0x30] sm:$0xff]
    %v105 = vld [vmem:[#allocation5 + $0x38] sm:$0xff]
    %v106 = vld [vmem:[#allocation5 + $0x40] sm:$0xff]
    %v107 = vld [vmem:[#allocation5 + $0x48] sm:$0xff]
    %v108 = vld [vmem:[#allocation5 + $0x50] sm:$0xff]
    %v109 = vld [vmem:[#allocation5 + $0x58] sm:$0xff]
    %v110 = vld [vmem:[#allocation5 + $0x60] sm:$0xff]
    %v111 = vld [vmem:[#allocation5 + $0x68] sm:$0xff]
    %v112 = vld [vmem:[#allocation5 + $0x70] sm:$0xff]
    %v113 = vld [vmem:[#allocation5 + $0x78] sm:$0xff]
    %v114 = vld [vmem:[#allocation5 + $0x80] sm:$0xff]
    %v115 = vld [vmem:[#allocation5 + $0x88] sm:$0xff]
    %v116 = vld [vmem:[#allocation5 + $0x90] sm:$0xff]
    %v117 = vld [vmem:[#allocation5 + $0x98] sm:$0xff]
    %v118 = vld [vmem:[#allocation5 + $0xa0] sm:$0xff]
    %v119 = vld [vmem:[#allocation5 + $0xa8] sm:$0xff]
    %v120 = vld [vmem:[#allocation5 + $0xb0] sm:$0xff]
    %v121 = vld [vmem:[#allocation5 + $0xb8] sm:$0xff]
    %v122 = vld [vmem:[#allocation5 + $0xc0] sm:$0xff]
    %v123 = vld [vmem:[#allocation5 + $0xc8] sm:$0xff]
    %v124 = vld [vmem:[#allocation5 + $0xd0] sm:$0xff]
    %v125 = vld [vmem:[#allocation5 + $0xd8] sm:$0xff]
    %v126 = vld [vmem:[#allocation5 + $0xe0] sm:$0xff]
    %v127 = vld [vmem:[#allocation5 + $0xe8] sm:$0xff]
    %v128 = vld [vmem:[#allocation5 + $0xf0] sm:$0xff]
    %v129 = vld [vmem:[#allocation5 + $0xf8] sm:$0xff]
    %v130 = vld [vmem:[#allocation5 + $0x100] sm:$0xff]
    %v131 = vld [vmem:[#allocation5 + $0x108] sm:$0xff]
    %v132 = vld [vmem:[#allocation5 + $0x110] sm:$0xff]
    %v133 = vld [vmem:[#allocation5 + $0x118] sm:$0xff]
    %v134 = vld [vmem:[#allocation5 + $0x120] sm:$0xff]
    %v135 = vld [vmem:[#allocation5 + $0x128] sm:$0xff]
    %v136 = vld [vmem:[#allocation5 + $0x130] sm:$0xff]
    %v137 = vld [vmem:[#allocation5 + $0x138] sm:$0xff]
    %v138 = vld [vmem:[#allocation5 + $0x140] sm:$0xff]
    %v139 = vld [vmem:[#allocation5 + $0x148] sm:$0xff]
    %v140 = vld [vmem:[#allocation5 + $0x150] sm:$0xff]
    %v141 = vld [vmem:[#allocation5 + $0x158] sm:$0xff]
    %v142 = vld [vmem:[#allocation5 + $0x160] sm:$0xff]
    %v143 = vld [vmem:[#allocation5 + $0x168] sm:$0xff]
    %v144 = vld [vmem:[#allocation5 + $0x170] sm:$0xff]
    %v145 = vld [vmem:[#allocation5 + $0x178] sm:$0xff]
    %v146 = vld [vmem:[#allocation5 + $0x180] sm:$0xff]
    %v147 = vld [vmem:[#allocation5 + $0x188] sm:$0xff]
    %v148 = vld [vmem:[#allocation5 + $0x190] sm:$0xff]
    %v149 = vld [vmem:[#allocation5 + $0x198] sm:$0xff]
    %v150 = vld [vmem:[#allocation5 + $0x1a0] sm:$0xff]
    %v151 = vld [vmem:[#allocation5 + $0x1a8] sm:$0xff]
    %v152 = vld [vmem:[#allocation5 + $0x1b0] sm:$0xff]
    %v153 = vld [vmem:[#allocation5 + $0x1b8] sm:$0xff]
    %v154 = vld [vmem:[#allocation5 + $0x1c0] sm:$0xff]
    %v155 = vld [vmem:[#allocation5 + $0x1c8] sm:$0xff]
    %v156 = vld [vmem:[#allocation5 + $0x1d0] sm:$0xff]
    %v157 = vld [vmem:[#allocation5 + $0x1d8] sm:$0xff]
    %v158 = vld [vmem:[#allocation5 + $0x1e0] sm:$0xff]
    %v159 = vld [vmem:[#allocation5 + $0x1e8] sm:$0xff]
    %v160 = vld [vmem:[#allocation5 + $0x1f0] sm:$0xff]
    %v161 = vld [vmem:[#allocation5 + $0x1f8] sm:$0xff]
    %v162 = vld [vmem:[#allocation5 + $0x200] sm:$0xff]
    %v163 = vld [vmem:[#allocation5 + $0x208] sm:$0xff]
    %v164 = vld [vmem:[#allocation5 + $0x210] sm:$0xff]
    %v165 = vld [vmem:[#allocation5 + $0x218] sm:$0xff]
    %v166 = vld [vmem:[#allocation5 + $0x220] sm:$0xff]
    %v167 = vld [vmem:[#allocation5 + $0x228] sm:$0xff]
    %v168 = vld [vmem:[#allocation5 + $0x230] sm:$0xff]
    %v169 = vld [vmem:[#allocation5 + $0x238] sm:$0xff]
    %v170 = vld [vmem:[#allocation5 + $0x240] sm:$0xff]
    %v171 = vld [vmem:[#allocation5 + $0x248] sm:$0xff]
    %v172 = vld [vmem:[#allocation5 + $0x250] sm:$0xff]
    %v173 = vld [vmem:[#allocation5 + $0x258] sm:$0xff]
    %v174 = vld [vmem:[#allocation5 + $0x260] sm:$0xff]
    %v175 = vld [vmem:[#allocation5 + $0x268] sm:$0xff]
    %v176 = vld [vmem:[#allocation5 + $0x270] sm:$0xff]
    %v177 = vld [vmem:[#allocation5 + $0x278] sm:$0xff]
    %v178 = vld [vmem:[#allocation5 + $0x280] sm:$0xff]
    %v179 = vld [vmem:[#allocation5 + $0x288] sm:$0xff]
    %v180 = vld [vmem:[#allocation5 + $0x290] sm:$0xff]
    %v181 = vld [vmem:[#allocation5 + $0x298] sm:$0xff]
    %v182 = vld [vmem:[#allocation5 + $0x2a0] sm:$0xff]
    %v183 = vld [vmem:[#allocation5 + $0x2a8] sm:$0xff]
    %v184 = vld [vmem:[#allocation5 + $0x2b0] sm:$0xff]
    %v185 = vld [vmem:[#allocation5 + $0x2b8] sm:$0xff]
    %v186 = vld [vmem:[#allocation5 + $0x2c0] sm:$0xff]
    %v187 = vld [vmem:[#allocation5 + $0x2c8] sm:$0xff]
    %v188 = vld [vmem:[#allocation5 + $0x2d0] sm:$0xff]
    %v189 = vld [vmem:[#allocation5 + $0x2d8] sm:$0xff]
    %v190 = vld [vmem:[#allocation5 + $0x2e0] sm:$0xff]
    %v191 = vld [vmem:[#allocation5 + $0x2e8] sm:$0xff]
    %v192 = vld [vmem:[#allocation5 + $0x2f0] sm:$0xff]
    %v193 = vld [vmem:[#allocation5 + $0x2f8] sm:$0xff]
    %v194 = vld [vmem:[#allocation5 + $0x300] sm:$0xff]
    %v195 = vld [vmem:[#allocation5 + $0x308] sm:$0xff]
    %v196 = vld [vmem:[#allocation5 + $0x310] sm:$0xff]
    %v197 = vld [vmem:[#allocation5 + $0x318] sm:$0xff]
    %v198 = vld [vmem:[#allocation5 + $0x320] sm:$0xff]
    %v199 = vld [vmem:[#allocation5 + $0x328] sm:$0xff]
    %v200 = vld [vmem:[#allocation5 + $0x330] sm:$0xff]
    %v201 = vld [vmem:[#allocation5 + $0x338] sm:$0xff]
    %v202 = vld [vmem:[#allocation5 + $0x340] sm:$0xff]
    %v203 = vld [vmem:[#allocation5 + $0x348] sm:$0xff]
    %v204 = vld [vmem:[#allocation5 + $0x350] sm:$0xff]
    %v205 = vld [vmem:[#allocation5 + $0x358] sm:$0xff]
    %v206 = vld [vmem:[#allocation5 + $0x360] sm:$0xff]
    %v207 = vld [vmem:[#allocation5 + $0x368] sm:$0xff]
    %v208 = vld [vmem:[#allocation5 + $0x370] sm:$0xff]
    %v209 = vld [vmem:[#allocation5 + $0x378] sm:$0xff]
    %v210 = vld [vmem:[#allocation5 + $0x380] sm:$0xff]
    %v211 = vld [vmem:[#allocation5 + $0x388] sm:$0xff]
    %v212 = vld [vmem:[#allocation5 + $0x390] sm:$0xff]
    %v213 = vld [vmem:[#allocation5 + $0x398] sm:$0xff]
    %v214 = vld [vmem:[#allocation5 + $0x3a0] sm:$0xff]
    %v215 = vld [vmem:[#allocation5 + $0x3a8] sm:$0xff]
    %v216 = vld [vmem:[#allocation5 + $0x3b0] sm:$0xff]
    %v217 = vld [vmem:[#allocation5 + $0x3b8] sm:$0xff]
    %v218 = vld [vmem:[#allocation5 + $0x3c0] sm:$0xff]
    %v219 = vld [vmem:[#allocation5 + $0x3c8] sm:$0xff]
    %v220 = vld [vmem:[#allocation5 + $0x3d0] sm:$0xff]
    %v221 = vld [vmem:[#allocation5 + $0x3d8] sm:$0xff]
    %v222 = vld [vmem:[#allocation5 + $0x3e0] sm:$0xff]
    %v223 = vld [vmem:[#allocation5 + $0x3e8] sm:$0xff]
    %v224 = vld [vmem:[#allocation5 + $0x3f0] sm:$0xff]
    %v225 = vld [vmem:[#allocation5 + $0x3f8] sm:$0xff]
    %v226 = vld [vmem:[#allocation7] sm:$0xff]
    %v228 = vlaneseq
    %v229 = vshrl.u32 %v228, 7
    %v230 = vsub.s32 0, %v229
    %v231 = vrot.slane %v226, %v230
    %v232 = vlaneseq
    %v233 = vshrl.u32 %v232, 7
    %v234 = vsub.s32 1, %v233
    %v235 = vrot.slane %v226, %v234
    %v236 = vlaneseq
    %v237 = vshrl.u32 %v236, 7
    %v238 = vsub.s32 2, %v237
    %v239 = vrot.slane %v226, %v238
    %v240 = vlaneseq
    %v241 = vshrl.u32 %v240, 7
    %v242 = vsub.s32 3, %v241
    %v243 = vrot.slane %v226, %v242
    %v244 = vlaneseq
    %v245 = vshrl.u32 %v244, 7
    %v246 = vsub.s32 4, %v245
    %v247 = vrot.slane %v226, %v246
    %v248 = vlaneseq
    %v249 = vshrl.u32 %v248, 7
    %v250 = vsub.s32 5, %v249
    %v251 = vrot.slane %v226, %v250
    %v252 = vlaneseq
    %v253 = vshrl.u32 %v252, 7
    %v254 = vsub.s32 6, %v253
    %v255 = vrot.slane %v226, %v254
    %v256 = vlaneseq
    %v257 = vshrl.u32 %v256, 7
    %v258 = vsub.s32 7, %v257
    %v259 = vrot.slane %v226, %v258
    %v396 = vunpack.c.l.b16 %v98
    %v397 = vunpack.c.h.b16 %v98
    %v398 = vunpack.c.l.b16 %v99
    %v399 = vunpack.c.h.b16 %v99
    %v400 = vunpack.c.l.b16 %v100
    %v401 = vunpack.c.h.b16 %v100
    %v402 = vunpack.c.l.b16 %v101
    %v403 = vunpack.c.h.b16 %v101
    %v404 = vunpack.c.l.b16 %v102
    %v405 = vunpack.c.h.b16 %v102
    %v406 = vunpack.c.l.b16 %v103
    %v407 = vunpack.c.h.b16 %v103
    %v408 = vunpack.c.l.b16 %v104
    %v409 = vunpack.c.h.b16 %v104
    %v410 = vunpack.c.l.b16 %v105
    %v411 = vunpack.c.h.b16 %v105
    %v412 = vunpack.c.l.b16 %v106
    %v413 = vunpack.c.h.b16 %v106
    %v414 = vunpack.c.l.b16 %v107
    %v415 = vunpack.c.h.b16 %v107
    %v416 = vunpack.c.l.b16 %v108
    %v417 = vunpack.c.h.b16 %v108
    %v418 = vunpack.c.l.b16 %v109
    %v419 = vunpack.c.h.b16 %v109
    %v420 = vunpack.c.l.b16 %v110
    %v421 = vunpack.c.h.b16 %v110
    %v422 = vunpack.c.l.b16 %v111
    %v423 = vunpack.c.h.b16 %v111
    %v424 = vunpack.c.l.b16 %v112
    %v425 = vunpack.c.h.b16 %v112
    %v426 = vunpack.c.l.b16 %v113
    %v427 = vunpack.c.h.b16 %v113
    %v428 = vunpack.c.l.b16 %v114
    %v429 = vunpack.c.h.b16 %v114
    %v430 = vunpack.c.l.b16 %v115
    %v431 = vunpack.c.h.b16 %v115
    %v432 = vunpack.c.l.b16 %v116
    %v433 = vunpack.c.h.b16 %v116
    %v434 = vunpack.c.l.b16 %v117
    %v435 = vunpack.c.h.b16 %v117
    %v436 = vunpack.c.l.b16 %v118
    %v437 = vunpack.c.h.b16 %v118
    %v438 = vunpack.c.l.b16 %v119
    %v439 = vunpack.c.h.b16 %v119
    %v440 = vunpack.c.l.b16 %v120
    %v441 = vunpack.c.h.b16 %v120
    %v442 = vunpack.c.l.b16 %v121
    %v443 = vunpack.c.h.b16 %v121
    %v444 = vunpack.c.l.b16 %v122
    %v445 = vunpack.c.h.b16 %v122
    %v446 = vunpack.c.l.b16 %v123
    %v447 = vunpack.c.h.b16 %v123
    %v448 = vunpack.c.l.b16 %v124
    %v449 = vunpack.c.h.b16 %v124
    %v450 = vunpack.c.l.b16 %v125
    %v451 = vunpack.c.h.b16 %v125
    %v452 = vunpack.c.l.b16 %v126
    %v453 = vunpack.c.h.b16 %v126
    %v454 = vunpack.c.l.b16 %v127
    %v455 = vunpack.c.h.b16 %v127
    %v456 = vunpack.c.l.b16 %v128
    %v457 = vunpack.c.h.b16 %v128
    %v458 = vunpack.c.l.b16 %v129
    %v459 = vunpack.c.h.b16 %v129
    %v460 = vunpack.c.l.b16 %v130
    %v461 = vunpack.c.h.b16 %v130
    %v462 = vunpack.c.l.b16 %v131
    %v463 = vunpack.c.h.b16 %v131
    %v464 = vunpack.c.l.b16 %v132
    %v465 = vunpack.c.h.b16 %v132
    %v466 = vunpack.c.l.b16 %v133
    %v467 = vunpack.c.h.b16 %v133
    %v468 = vunpack.c.l.b16 %v134
    %v469 = vunpack.c.h.b16 %v134
    %v470 = vunpack.c.l.b16 %v135
    %v471 = vunpack.c.h.b16 %v135
    %v472 = vunpack.c.l.b16 %v136
    %v473 = vunpack.c.h.b16 %v136
    %v474 = vunpack.c.l.b16 %v137
    %v475 = vunpack.c.h.b16 %v137
    %v476 = vunpack.c.l.b16 %v138
    %v477 = vunpack.c.h.b16 %v138
    %v478 = vunpack.c.l.b16 %v139
    %v479 = vunpack.c.h.b16 %v139
    %v480 = vunpack.c.l.b16 %v140
    %v481 = vunpack.c.h.b16 %v140
    %v482 = vunpack.c.l.b16 %v141
    %v483 = vunpack.c.h.b16 %v141
    %v484 = vunpack.c.l.b16 %v142
    %v485 = vunpack.c.h.b16 %v142
    %v486 = vunpack.c.l.b16 %v143
    %v487 = vunpack.c.h.b16 %v143
    %v488 = vunpack.c.l.b16 %v144
    %v489 = vunpack.c.h.b16 %v144
    %v490 = vunpack.c.l.b16 %v145
    %v491 = vunpack.c.h.b16 %v145
    %v492 = vunpack.c.l.b16 %v146
    %v493 = vunpack.c.h.b16 %v146
    %v494 = vunpack.c.l.b16 %v147
    %v495 = vunpack.c.h.b16 %v147
    %v496 = vunpack.c.l.b16 %v148
    %v497 = vunpack.c.h.b16 %v148
    %v498 = vunpack.c.l.b16 %v149
    %v499 = vunpack.c.h.b16 %v149
    %v500 = vunpack.c.l.b16 %v150
    %v501 = vunpack.c.h.b16 %v150
    %v502 = vunpack.c.l.b16 %v151
    %v503 = vunpack.c.h.b16 %v151
    %v504 = vunpack.c.l.b16 %v152
    %v505 = vunpack.c.h.b16 %v152
    %v506 = vunpack.c.l.b16 %v153
    %v507 = vunpack.c.h.b16 %v153
    %v508 = vunpack.c.l.b16 %v154
    %v509 = vunpack.c.h.b16 %v154
    %v510 = vunpack.c.l.b16 %v155
    %v511 = vunpack.c.h.b16 %v155
    %v512 = vunpack.c.l.b16 %v156
    %v513 = vunpack.c.h.b16 %v156
    %v514 = vunpack.c.l.b16 %v157
    %v515 = vunpack.c.h.b16 %v157
    %v516 = vunpack.c.l.b16 %v158
    %v517 = vunpack.c.h.b16 %v158
    %v518 = vunpack.c.l.b16 %v159
    %v519 = vunpack.c.h.b16 %v159
    %v520 = vunpack.c.l.b16 %v160
    %v521 = vunpack.c.h.b16 %v160
    %v522 = vunpack.c.l.b16 %v161
    %v523 = vunpack.c.h.b16 %v161
    %v524 = vunpack.c.l.b16 %v162
    %v525 = vunpack.c.h.b16 %v162
    %v526 = vunpack.c.l.b16 %v163
    %v527 = vunpack.c.h.b16 %v163
    %v528 = vunpack.c.l.b16 %v164
    %v529 = vunpack.c.h.b16 %v164
    %v530 = vunpack.c.l.b16 %v165
    %v531 = vunpack.c.h.b16 %v165
    %v532 = vunpack.c.l.b16 %v166
    %v533 = vunpack.c.h.b16 %v166
    %v534 = vunpack.c.l.b16 %v167
    %v535 = vunpack.c.h.b16 %v167
    %v536 = vunpack.c.l.b16 %v168
    %v537 = vunpack.c.h.b16 %v168
    %v538 = vunpack.c.l.b16 %v169
    %v539 = vunpack.c.h.b16 %v169
    %v540 = vunpack.c.l.b16 %v170
    %v541 = vunpack.c.h.b16 %v170
    %v542 = vunpack.c.l.b16 %v171
    %v543 = vunpack.c.h.b16 %v171
    %v544 = vunpack.c.l.b16 %v172
    %v545 = vunpack.c.h.b16 %v172
    %v546 = vunpack.c.l.b16 %v173
    %v547 = vunpack.c.h.b16 %v173
    %v548 = vunpack.c.l.b16 %v174
    %v549 = vunpack.c.h.b16 %v174
    %v550 = vunpack.c.l.b16 %v175
    %v551 = vunpack.c.h.b16 %v175
    %v552 = vunpack.c.l.b16 %v176
    %v553 = vunpack.c.h.b16 %v176
    %v554 = vunpack.c.l.b16 %v177
    %v555 = vunpack.c.h.b16 %v177
    %v556 = vunpack.c.l.b16 %v178
    %v557 = vunpack.c.h.b16 %v178
    %v558 = vunpack.c.l.b16 %v179
    %v559 = vunpack.c.h.b16 %v179
    %v560 = vunpack.c.l.b16 %v180
    %v561 = vunpack.c.h.b16 %v180
    %v562 = vunpack.c.l.b16 %v181
    %v563 = vunpack.c.h.b16 %v181
    %v564 = vunpack.c.l.b16 %v182
    %v565 = vunpack.c.h.b16 %v182
    %v566 = vunpack.c.l.b16 %v183
    %v567 = vunpack.c.h.b16 %v183
    %v568 = vunpack.c.l.b16 %v184
    %v569 = vunpack.c.h.b16 %v184
    %v570 = vunpack.c.l.b16 %v185
    %v571 = vunpack.c.h.b16 %v185
    %v572 = vunpack.c.l.b16 %v186
    %v573 = vunpack.c.h.b16 %v186
    %v574 = vunpack.c.l.b16 %v187
    %v575 = vunpack.c.h.b16 %v187
    %v576 = vunpack.c.l.b16 %v188
    %v577 = vunpack.c.h.b16 %v188
    %v578 = vunpack.c.l.b16 %v189
    %v579 = vunpack.c.h.b16 %v189
    %v580 = vunpack.c.l.b16 %v190
    %v581 = vunpack.c.h.b16 %v190
    %v582 = vunpack.c.l.b16 %v191
    %v583 = vunpack.c.h.b16 %v191
    %v584 = vunpack.c.l.b16 %v192
    %v585 = vunpack.c.h.b16 %v192
    %v586 = vunpack.c.l.b16 %v193
    %v587 = vunpack.c.h.b16 %v193
    %v588 = vunpack.c.l.b16 %v194
    %v589 = vunpack.c.h.b16 %v194
    %v590 = vunpack.c.l.b16 %v195
    %v591 = vunpack.c.h.b16 %v195
    %v592 = vunpack.c.l.b16 %v196
    %v593 = vunpack.c.h.b16 %v196
    %v594 = vunpack.c.l.b16 %v197
    %v595 = vunpack.c.h.b16 %v197
    %v596 = vunpack.c.l.b16 %v198
    %v597 = vunpack.c.h.b16 %v198
    %v598 = vunpack.c.l.b16 %v199
    %v599 = vunpack.c.h.b16 %v199
    %v600 = vunpack.c.l.b16 %v200
    %v601 = vunpack.c.h.b16 %v200
    %v602 = vunpack.c.l.b16 %v201
    %v603 = vunpack.c.h.b16 %v201
    %v604 = vunpack.c.l.b16 %v202
    %v605 = vunpack.c.h.b16 %v202
    %v606 = vunpack.c.l.b16 %v203
    %v607 = vunpack.c.h.b16 %v203
    %v608 = vunpack.c.l.b16 %v204
    %v609 = vunpack.c.h.b16 %v204
    %v610 = vunpack.c.l.b16 %v205
    %v611 = vunpack.c.h.b16 %v205
    %v612 = vunpack.c.l.b16 %v206
    %v613 = vunpack.c.h.b16 %v206
    %v614 = vunpack.c.l.b16 %v207
    %v615 = vunpack.c.h.b16 %v207
    %v616 = vunpack.c.l.b16 %v208
    %v617 = vunpack.c.h.b16 %v208
    %v618 = vunpack.c.l.b16 %v209
    %v619 = vunpack.c.h.b16 %v209
    %v620 = vunpack.c.l.b16 %v210
    %v621 = vunpack.c.h.b16 %v210
    %v622 = vunpack.c.l.b16 %v211
    %v623 = vunpack.c.h.b16 %v211
    %v624 = vunpack.c.l.b16 %v212
    %v625 = vunpack.c.h.b16 %v212
    %v626 = vunpack.c.l.b16 %v213
    %v627 = vunpack.c.h.b16 %v213
    %v628 = vunpack.c.l.b16 %v214
    %v629 = vunpack.c.h.b16 %v214
    %v630 = vunpack.c.l.b16 %v215
    %v631 = vunpack.c.h.b16 %v215
    %v632 = vunpack.c.l.b16 %v216
    %v633 = vunpack.c.h.b16 %v216
    %v634 = vunpack.c.l.b16 %v217
    %v635 = vunpack.c.h.b16 %v217
    %v636 = vunpack.c.l.b16 %v218
    %v637 = vunpack.c.h.b16 %v218
    %v638 = vunpack.c.l.b16 %v219
    %v639 = vunpack.c.h.b16 %v219
    %v640 = vunpack.c.l.b16 %v220
    %v641 = vunpack.c.h.b16 %v220
    %v642 = vunpack.c.l.b16 %v221
    %v643 = vunpack.c.h.b16 %v221
    %v644 = vunpack.c.l.b16 %v222
    %v645 = vunpack.c.h.b16 %v222
    %v646 = vunpack.c.l.b16 %v223
    %v647 = vunpack.c.h.b16 %v223
    %v648 = vunpack.c.l.b16 %v224
    %v649 = vunpack.c.h.b16 %v224
    %v650 = vunpack.c.l.b16 %v225
    %v651 = vunpack.c.h.b16 %v225
    %v652 = vpack.c.b16 %v404, %v396
    %v653 = vpack.c.b16 %v405, %v397
    %v654 = vpack.c.b16 %v406, %v398
    %v655 = vpack.c.b16 %v407, %v399
    %v656 = vpack.c.b16 %v408, %v400
    %v657 = vpack.c.b16 %v409, %v401
    %v658 = vpack.c.b16 %v410, %v402
    %v659 = vpack.c.b16 %v411, %v403
    %v660 = vpack.c.b16 %v420, %v412
    %v661 = vpack.c.b16 %v421, %v413
    %v662 = vpack.c.b16 %v422, %v414
    %v663 = vpack.c.b16 %v423, %v415
    %v664 = vpack.c.b16 %v424, %v416
    %v665 = vpack.c.b16 %v425, %v417
    %v666 = vpack.c.b16 %v426, %v418
    %v667 = vpack.c.b16 %v427, %v419
    %v668 = vpack.c.b16 %v436, %v428
    %v669 = vpack.c.b16 %v437, %v429
    %v670 = vpack.c.b16 %v438, %v430
    %v671 = vpack.c.b16 %v439, %v431
    %v672 = vpack.c.b16 %v440, %v432
    %v673 = vpack.c.b16 %v441, %v433
    %v674 = vpack.c.b16 %v442, %v434
    %v675 = vpack.c.b16 %v443, %v435
    %v676 = vpack.c.b16 %v452, %v444
    %v677 = vpack.c.b16 %v453, %v445
    %v678 = vpack.c.b16 %v454, %v446
    %v679 = vpack.c.b16 %v455, %v447
    %v680 = vpack.c.b16 %v456, %v448
    %v681 = vpack.c.b16 %v457, %v449
    %v682 = vpack.c.b16 %v458, %v450
    %v683 = vpack.c.b16 %v459, %v451
    %v684 = vpack.c.b16 %v468, %v460
    %v685 = vpack.c.b16 %v469, %v461
    %v686 = vpack.c.b16 %v470, %v462
    %v687 = vpack.c.b16 %v471, %v463
    %v688 = vpack.c.b16 %v472, %v464
    %v689 = vpack.c.b16 %v473, %v465
    %v690 = vpack.c.b16 %v474, %v466
    %v691 = vpack.c.b16 %v475, %v467
    %v692 = vpack.c.b16 %v484, %v476
    %v693 = vpack.c.b16 %v485, %v477
    %v694 = vpack.c.b16 %v486, %v478
    %v695 = vpack.c.b16 %v487, %v479
    %v696 = vpack.c.b16 %v488, %v480
    %v697 = vpack.c.b16 %v489, %v481
    %v698 = vpack.c.b16 %v490, %v482
    %v699 = vpack.c.b16 %v491, %v483
    %v700 = vpack.c.b16 %v500, %v492
    %v701 = vpack.c.b16 %v501, %v493
    %v702 = vpack.c.b16 %v502, %v494
    %v703 = vpack.c.b16 %v503, %v495
    %v704 = vpack.c.b16 %v504, %v496
    %v705 = vpack.c.b16 %v505, %v497
    %v706 = vpack.c.b16 %v506, %v498
    %v707 = vpack.c.b16 %v507, %v499
    %v708 = vpack.c.b16 %v516, %v508
    %v709 = vpack.c.b16 %v517, %v509
    %v710 = vpack.c.b16 %v518, %v510
    %v711 = vpack.c.b16 %v519, %v511
    %v712 = vpack.c.b16 %v520, %v512
    %v713 = vpack.c.b16 %v521, %v513
    %v714 = vpack.c.b16 %v522, %v514
    %v715 = vpack.c.b16 %v523, %v515
    %v716 = vpack.c.b16 %v532, %v524
    %v717 = vpack.c.b16 %v533, %v525
    %v718 = vpack.c.b16 %v534, %v526
    %v719 = vpack.c.b16 %v535, %v527
    %v720 = vpack.c.b16 %v536, %v528
    %v721 = vpack.c.b16 %v537, %v529
    %v722 = vpack.c.b16 %v538, %v530
    %v723 = vpack.c.b16 %v539, %v531
    %v724 = vpack.c.b16 %v548, %v540
    %v725 = vpack.c.b16 %v549, %v541
    %v726 = vpack.c.b16 %v550, %v542
    %v727 = vpack.c.b16 %v551, %v543
    %v728 = vpack.c.b16 %v552, %v544
    %v729 = vpack.c.b16 %v553, %v545
    %v730 = vpack.c.b16 %v554, %v546
    %v731 = vpack.c.b16 %v555, %v547
    %v732 = vpack.c.b16 %v564, %v556
    %v733 = vpack.c.b16 %v565, %v557
    %v734 = vpack.c.b16 %v566, %v558
    %v735 = vpack.c.b16 %v567, %v559
    %v736 = vpack.c.b16 %v568, %v560
    %v737 = vpack.c.b16 %v569, %v561
    %v738 = vpack.c.b16 %v570, %v562
    %v739 = vpack.c.b16 %v571, %v563
    %v740 = vpack.c.b16 %v580, %v572
    %v741 = vpack.c.b16 %v581, %v573
    %v742 = vpack.c.b16 %v582, %v574
    %v743 = vpack.c.b16 %v583, %v575
    %v744 = vpack.c.b16 %v584, %v576
    %v745 = vpack.c.b16 %v585, %v577
    %v746 = vpack.c.b16 %v586, %v578
    %v747 = vpack.c.b16 %v587, %v579
    %v748 = vpack.c.b16 %v596, %v588
    %v749 = vpack.c.b16 %v597, %v589
    %v750 = vpack.c.b16 %v598, %v590
    %v751 = vpack.c.b16 %v599, %v591
    %v752 = vpack.c.b16 %v600, %v592
    %v753 = vpack.c.b16 %v601, %v593
    %v754 = vpack.c.b16 %v602, %v594
    %v755 = vpack.c.b16 %v603, %v595
    %v756 = vpack.c.b16 %v612, %v604
    %v757 = vpack.c.b16 %v613, %v605
    %v758 = vpack.c.b16 %v614, %v606
    %v759 = vpack.c.b16 %v615, %v607
    %v760 = vpack.c.b16 %v616, %v608
    %v761 = vpack.c.b16 %v617, %v609
    %v762 = vpack.c.b16 %v618, %v610
    %v763 = vpack.c.b16 %v619, %v611
    %v764 = vpack.c.b16 %v628, %v620
    %v765 = vpack.c.b16 %v629, %v621
    %v766 = vpack.c.b16 %v630, %v622
    %v767 = vpack.c.b16 %v631, %v623
    %v768 = vpack.c.b16 %v632, %v624
    %v769 = vpack.c.b16 %v633, %v625
    %v770 = vpack.c.b16 %v634, %v626
    %v771 = vpack.c.b16 %v635, %v627
    %v772 = vpack.c.b16 %v644, %v636
    %v773 = vpack.c.b16 %v645, %v637
    %v774 = vpack.c.b16 %v646, %v638
    %v775 = vpack.c.b16 %v647, %v639
    %v776 = vpack.c.b16 %v648, %v640
    %v777 = vpack.c.b16 %v649, %v641
    %v778 = vpack.c.b16 %v650, %v642
    %v779 = vpack.c.b16 %v651, %v643
    %908 = vmatprep.subr.bf16.mxu0 %v709
    %909 = vmatpush1.bf16.msra.mxu0 %v708
    %910 = vmatprep.subr.bf16.mxu0 %v701
    %911 = vmatpush1.bf16.msra.mxu0 %v700
    %912 = vmatprep.subr.bf16.mxu0 %v693
    %913 = vmatpush1.bf16.msra.mxu0 %v692
    %914 = vmatprep.subr.bf16.mxu0 %v685
    %915 = vmatpush1.bf16.msra.mxu0 %v684
    %916 = vmatprep.subr.bf16.mxu0 %v677
    %917 = vmatpush1.bf16.msra.mxu0 %v676
    %918 = vmatprep.subr.bf16.mxu0 %v669
    %919 = vmatpush1.bf16.msra.mxu0 %v668
    %920 = vmatprep.subr.bf16.mxu0 %v661
    %921 = vmatpush1.bf16.msra.mxu0 %v660
    %922 = vmatprep.subr.bf16.mxu0 %v653
    %923 = vmatpush1.bf16.msra.mxu0 %v652
    %924 = vmatprep.subr.bf16.mxu0 %v773
    %925 = vmatpush2.bf16.msra.mxu0 %v772
    %926 = vmatprep.subr.bf16.mxu0 %v765
    %927 = vmatpush2.bf16.msra.mxu0 %v764
    %928 = vmatprep.subr.bf16.mxu0 %v757
    %929 = vmatpush2.bf16.msra.mxu0 %v756
    %930 = vmatprep.subr.bf16.mxu0 %v749
    %931 = vmatpush2.bf16.msra.mxu0 %v748
    %932 = vmatprep.subr.bf16.mxu0 %v741
    %933 = vmatpush2.bf16.msra.mxu0 %v740
    %934 = vmatprep.subr.bf16.mxu0 %v733
    %935 = vmatpush2.bf16.msra.mxu0 %v732
    %936 = vmatprep.subr.bf16.mxu0 %v725
    %937 = vmatpush2.bf16.msra.mxu0 %v724
    %938 = vmatprep.subr.bf16.mxu0 %v717
    %939 = vmatpush2.bf16.msra.mxu0 %v716
    %940 = vmatprep.mubr.bf16.mxu0 %v91
    %941 = vmatmul.mubr.bf16.gmra.mxu0 %v90
    %v942 = vpop.f32.mrf.mxu0
    %v943 = vadd.f32 %v231, %v942
    %v944 = vpop.f32.mrf.mxu0
    %v945 = vadd.f32 %v235, %v944
    %v946 = vpop.f32.mrf.mxu0
    %v947 = vadd.f32 %v231, %v946
    %v948 = vpop.f32.mrf.mxu0
    %v949 = vadd.f32 %v235, %v948
    %950 = vmatprep.mubr.bf16.mxu0 %v93
    %951 = vmatmul.mubr.bf16.gmra.mxu0 %v92
    %v952 = vpop.f32.mrf.mxu0
    %v953 = vadd.f32 %v231, %v952
    %v954 = vpop.f32.mrf.mxu0
    %v955 = vadd.f32 %v235, %v954
    %v956 = vpop.f32.mrf.mxu0
    %v957 = vadd.f32 %v231, %v956
    %v958 = vpop.f32.mrf.mxu0
    %v959 = vadd.f32 %v235, %v958
    %960 = vmatprep.mubr.bf16.mxu0 %v95
    %961 = vmatmul.mubr.bf16.gmra.mxu0 %v94
    %v962 = vpop.f32.mrf.mxu0
    %v963 = vadd.f32 %v231, %v962
    %v964 = vpop.f32.mrf.mxu0
    %v965 = vadd.f32 %v235, %v964
    %v966 = vpop.f32.mrf.mxu0
    %v967 = vadd.f32 %v231, %v966
    %v968 = vpop.f32.mrf.mxu0
    %v969 = vadd.f32 %v235, %v968
    %970 = vmatprep.mubr.bf16.mxu0 %v97
    %971 = vmatmul.mubr.bf16.gmra.mxu0 %v96
    %v972 = vpop.f32.mrf.mxu0
    %v973 = vadd.f32 %v231, %v972
    %v974 = vpop.f32.mrf.mxu0
    %v975 = vadd.f32 %v235, %v974
    %v976 = vpop.f32.mrf.mxu0
    %v977 = vadd.f32 %v231, %v976
    %v978 = vpop.f32.mrf.mxu0
    %v979 = vadd.f32 %v235, %v978
    %980 = vdwg.mxu0
    %981 = vmatprep.subr.bf16.mxu0 %v711
    %982 = vmatpush1.bf16.msra.mxu0 %v710
    %983 = vmatprep.subr.bf16.mxu0 %v703
    %984 = vmatpush1.bf16.msra.mxu0 %v702
    %985 = vmatprep.subr.bf16.mxu0 %v695
    %986 = vmatpush1.bf16.msra.mxu0 %v694
    %987 = vmatprep.subr.bf16.mxu0 %v687
    %988 = vmatpush1.bf16.msra.mxu0 %v686
    %989 = vmatprep.subr.bf16.mxu0 %v679
    %990 = vmatpush1.bf16.msra.mxu0 %v678
    %991 = vmatprep.subr.bf16.mxu0 %v671
    %992 = vmatpush1.bf16.msra.mxu0 %v670
    %993 = vmatprep.subr.bf16.mxu0 %v663
    %994 = vmatpush1.bf16.msra.mxu0 %v662
    %995 = vmatprep.subr.bf16.mxu0 %v655
    %996 = vmatpush1.bf16.msra.mxu0 %v654
    %997 = vmatprep.subr.bf16.mxu0 %v775
    %998 = vmatpush2.bf16.msra.mxu0 %v774
    %999 = vmatprep.subr.bf16.mxu0 %v767
    %1000 = vmatpush2.bf16.msra.mxu0 %v766
    %1001 = vmatprep.subr.bf16.mxu0 %v759
    %1002 = vmatpush2.bf16.msra.mxu0 %v758
    %1003 = vmatprep.subr.bf16.mxu0 %v751
    %1004 = vmatpush2.bf16.msra.mxu0 %v750
    %1005 = vmatprep.subr.bf16.mxu0 %v743
    %1006 = vmatpush2.bf16.msra.mxu0 %v742
    %1007 = vmatprep.subr.bf16.mxu0 %v735
    %1008 = vmatpush2.bf16.msra.mxu0 %v734
    %1009 = vmatprep.subr.bf16.mxu0 %v727
    %1010 = vmatpush2.bf16.msra.mxu0 %v726
    %1011 = vmatprep.subr.bf16.mxu0 %v719
    %1012 = vmatpush2.bf16.msra.mxu0 %v718
    %1013 = vmatprep.mubr.bf16.mxu0 %v91
    %1014 = vmatmul.mubr.bf16.gmra.mxu0 %v90
    %v1015 = vpop.f32.mrf.mxu0
    %v1016 = vadd.f32 %v239, %v1015
    %v1017 = vpop.f32.mrf.mxu0
    %v1018 = vadd.f32 %v243, %v1017
    %v1019 = vpop.f32.mrf.mxu0
    %v1020 = vadd.f32 %v239, %v1019
    %v1021 = vpop.f32.mrf.mxu0
    %v1022 = vadd.f32 %v243, %v1021
    %1023 = vmatprep.mubr.bf16.mxu0 %v93
    %1024 = vmatmul.mubr.bf16.gmra.mxu0 %v92
    %v1025 = vpop.f32.mrf.mxu0
    %v1026 = vadd.f32 %v239, %v1025
    %v1027 = vpop.f32.mrf.mxu0
    %v1028 = vadd.f32 %v243, %v1027
    %v1029 = vpop.f32.mrf.mxu0
    %v1030 = vadd.f32 %v239, %v1029
    %v1031 = vpop.f32.mrf.mxu0
    %v1032 = vadd.f32 %v243, %v1031
    %1033 = vmatprep.mubr.bf16.mxu0 %v95
    %1034 = vmatmul.mubr.bf16.gmra.mxu0 %v94
    %v1035 = vpop.f32.mrf.mxu0
    %v1036 = vadd.f32 %v239, %v1035
    %v1037 = vpop.f32.mrf.mxu0
    %v1038 = vadd.f32 %v243, %v1037
    %v1039 = vpop.f32.mrf.mxu0
    %v1040 = vadd.f32 %v239, %v1039
    %v1041 = vpop.f32.mrf.mxu0
    %v1042 = vadd.f32 %v243, %v1041
    %1043 = vmatprep.mubr.bf16.mxu0 %v97
    %1044 = vmatmul.mubr.bf16.gmra.mxu0 %v96
    %v1045 = vpop.f32.mrf.mxu0
    %v1046 = vadd.f32 %v239, %v1045
    %v1047 = vpop.f32.mrf.mxu0
    %v1048 = vadd.f32 %v243, %v1047
    %v1049 = vpop.f32.mrf.mxu0
    %v1050 = vadd.f32 %v239, %v1049
    %v1051 = vpop.f32.mrf.mxu0
    %v1052 = vadd.f32 %v243, %v1051
    %1053 = vdwg.mxu0
    %1054 = vmatprep.subr.bf16.mxu0 %v713
    %1055 = vmatpush1.bf16.msra.mxu0 %v712
    %1056 = vmatprep.subr.bf16.mxu0 %v705
    %1057 = vmatpush1.bf16.msra.mxu0 %v704
    %1058 = vmatprep.subr.bf16.mxu0 %v697
    %1059 = vmatpush1.bf16.msra.mxu0 %v696
    %1060 = vmatprep.subr.bf16.mxu0 %v689
    %1061 = vmatpush1.bf16.msra.mxu0 %v688
    %1062 = vmatprep.subr.bf16.mxu0 %v681
    %1063 = vmatpush1.bf16.msra.mxu0 %v680
    %1064 = vmatprep.subr.bf16.mxu0 %v673
    %1065 = vmatpush1.bf16.msra.mxu0 %v672
    %1066 = vmatprep.subr.bf16.mxu0 %v665
    %1067 = vmatpush1.bf16.msra.mxu0 %v664
    %1068 = vmatprep.subr.bf16.mxu0 %v657
    %1069 = vmatpush1.bf16.msra.mxu0 %v656
    %1070 = vmatprep.subr.bf16.mxu0 %v777
    %1071 = vmatpush2.bf16.msra.mxu0 %v776
    %1072 = vmatprep.subr.bf16.mxu0 %v769
    %1073 = vmatpush2.bf16.msra.mxu0 %v768
    %1074 = vmatprep.subr.bf16.mxu0 %v761
    %1075 = vmatpush2.bf16.msra.mxu0 %v760
    %1076 = vmatprep.subr.bf16.mxu0 %v753
    %1077 = vmatpush2.bf16.msra.mxu0 %v752
    %1078 = vmatprep.subr.bf16.mxu0 %v745
    %1079 = vmatpush2.bf16.msra.mxu0 %v744
    %1080 = vmatprep.subr.bf16.mxu0 %v737
    %1081 = vmatpush2.bf16.msra.mxu0 %v736
    %1082 = vmatprep.subr.bf16.mxu0 %v729
    %1083 = vmatpush2.bf16.msra.mxu0 %v728
    %1084 = vmatprep.subr.bf16.mxu0 %v721
    %1085 = vmatpush2.bf16.msra.mxu0 %v720
    %1086 = vmatprep.mubr.bf16.mxu0 %v91
    %1087 = vmatmul.mubr.bf16.gmra.mxu0 %v90
    %v1088 = vpop.f32.mrf.mxu0
    %v1089 = vadd.f32 %v247, %v1088
    %v1090 = vpop.f32.mrf.mxu0
    %v1091 = vadd.f32 %v251, %v1090
    %v1092 = vpop.f32.mrf.mxu0
    %v1093 = vadd.f32 %v247, %v1092
    %v1094 = vpop.f32.mrf.mxu0
    %v1095 = vadd.f32 %v251, %v1094
    %1096 = vmatprep.mubr.bf16.mxu0 %v93
    %1097 = vmatmul.mubr.bf16.gmra.mxu0 %v92
    %v1098 = vpop.f32.mrf.mxu0
    %v1099 = vadd.f32 %v247, %v1098
    %v1100 = vpop.f32.mrf.mxu0
    %v1101 = vadd.f32 %v251, %v1100
    %v1102 = vpop.f32.mrf.mxu0
    %v1103 = vadd.f32 %v247, %v1102
    %v1104 = vpop.f32.mrf.mxu0
    %v1105 = vadd.f32 %v251, %v1104
    %1106 = vmatprep.mubr.bf16.mxu0 %v95
    %1107 = vmatmul.mubr.bf16.gmra.mxu0 %v94
    %v1108 = vpop.f32.mrf.mxu0
    %v1109 = vadd.f32 %v247, %v1108
    %v1110 = vpop.f32.mrf.mxu0
    %v1111 = vadd.f32 %v251, %v1110
    %v1112 = vpop.f32.mrf.mxu0
    %v1113 = vadd.f32 %v247, %v1112
    %v1114 = vpop.f32.mrf.mxu0
    %v1115 = vadd.f32 %v251, %v1114
    %1116 = vmatprep.mubr.bf16.mxu0 %v97
    %1117 = vmatmul.mubr.bf16.gmra.mxu0 %v96
    %v1118 = vpop.f32.mrf.mxu0
    %v1119 = vadd.f32 %v247, %v1118
    %v1120 = vpop.f32.mrf.mxu0
    %v1121 = vadd.f32 %v251, %v1120
    %v1122 = vpop.f32.mrf.mxu0
    %v1123 = vadd.f32 %v247, %v1122
    %v1124 = vpop.f32.mrf.mxu0
    %v1125 = vadd.f32 %v251, %v1124
    %1126 = vdwg.mxu0
    %1127 = vmatprep.subr.bf16.mxu0 %v715
    %1128 = vmatpush1.bf16.msra.mxu0 %v714
    %1129 = vmatprep.subr.bf16.mxu0 %v707
    %1130 = vmatpush1.bf16.msra.mxu0 %v706
    %1131 = vmatprep.subr.bf16.mxu0 %v699
    %1132 = vmatpush1.bf16.msra.mxu0 %v698
    %1133 = vmatprep.subr.bf16.mxu0 %v691
    %1134 = vmatpush1.bf16.msra.mxu0 %v690
    %1135 = vmatprep.subr.bf16.mxu0 %v683
    %1136 = vmatpush1.bf16.msra.mxu0 %v682
    %1137 = vmatprep.subr.bf16.mxu0 %v675
    %1138 = vmatpush1.bf16.msra.mxu0 %v674
    %1139 = vmatprep.subr.bf16.mxu0 %v667
    %1140 = vmatpush1.bf16.msra.mxu0 %v666
    %1141 = vmatprep.subr.bf16.mxu0 %v659
    %1142 = vmatpush1.bf16.msra.mxu0 %v658
    %1143 = vmatprep.subr.bf16.mxu0 %v779
    %1144 = vmatpush2.bf16.msra.mxu0 %v778
    %1145 = vmatprep.subr.bf16.mxu0 %v771
    %1146 = vmatpush2.bf16.msra.mxu0 %v770
    %1147 = vmatprep.subr.bf16.mxu0 %v763
    %1148 = vmatpush2.bf16.msra.mxu0 %v762
    %1149 = vmatprep.subr.bf16.mxu0 %v755
    %1150 = vmatpush2.bf16.msra.mxu0 %v754
    %1151 = vmatprep.subr.bf16.mxu0 %v747
    %1152 = vmatpush2.bf16.msra.mxu0 %v746
    %1153 = vmatprep.subr.bf16.mxu0 %v739
    %1154 = vmatpush2.bf16.msra.mxu0 %v738
    %1155 = vmatprep.subr.bf16.mxu0 %v731
    %1156 = vmatpush2.bf16.msra.mxu0 %v730
    %1157 = vmatprep.subr.bf16.mxu0 %v723
    %1158 = vmatpush2.bf16.msra.mxu0 %v722
    %1159 = vmatprep.mubr.bf16.mxu0 %v91
    %1160 = vmatmul.mubr.bf16.gmra.mxu0 %v90
    %v1161 = vpop.f32.mrf.mxu0
    %v1162 = vadd.f32 %v255, %v1161
    %v1163 = vpop.f32.mrf.mxu0
    %v1164 = vadd.f32 %v259, %v1163
    %v1165 = vpop.f32.mrf.mxu0
    %v1166 = vadd.f32 %v255, %v1165
    %v1167 = vpop.f32.mrf.mxu0
    %v1168 = vadd.f32 %v259, %v1167
    %1169 = vmatprep.mubr.bf16.mxu0 %v93
    %1170 = vmatmul.mubr.bf16.gmra.mxu0 %v92
    %v1171 = vpop.f32.mrf.mxu0
    %v1172 = vadd.f32 %v255, %v1171
    %v1173 = vpop.f32.mrf.mxu0
    %v1174 = vadd.f32 %v259, %v1173
    %v1175 = vpop.f32.mrf.mxu0
    %v1176 = vadd.f32 %v255, %v1175
    %v1177 = vpop.f32.mrf.mxu0
    %v1178 = vadd.f32 %v259, %v1177
    %1179 = vmatprep.mubr.bf16.mxu0 %v95
    %1180 = vmatmul.mubr.bf16.gmra.mxu0 %v94
    %v1181 = vpop.f32.mrf.mxu0
    %v1182 = vadd.f32 %v255, %v1181
    %v1183 = vpop.f32.mrf.mxu0
    %v1184 = vadd.f32 %v259, %v1183
    %v1185 = vpop.f32.mrf.mxu0
    %v1186 = vadd.f32 %v255, %v1185
    %v1187 = vpop.f32.mrf.mxu0
    %v1188 = vadd.f32 %v259, %v1187
    %1189 = vmatprep.mubr.bf16.mxu0 %v97
    %1190 = vmatmul.mubr.bf16.gmra.mxu0 %v96
    %v1191 = vpop.f32.mrf.mxu0
    %v1192 = vadd.f32 %v255, %v1191
    %v1193 = vpop.f32.mrf.mxu0
    %v1194 = vadd.f32 %v259, %v1193
    %v1195 = vpop.f32.mrf.mxu0
    %v1196 = vadd.f32 %v255, %v1195
    %v1197 = vpop.f32.mrf.mxu0
    %v1198 = vadd.f32 %v259, %v1197
    %1199 = vdwg.mxu0
    %v1200 = vmax.f32 %v943, 0.0
    %v1201 = vmax.f32 %v945, 0.0
    %v1202 = vmax.f32 %v1016, 0.0
    %v1203 = vmax.f32 %v1018, 0.0
    %v1204 = vmax.f32 %v1089, 0.0
    %v1205 = vmax.f32 %v1091, 0.0
    %v1206 = vmax.f32 %v1162, 0.0
    %v1207 = vmax.f32 %v1164, 0.0
    %v1208 = vmax.f32 %v947, 0.0
    %v1209 = vmax.f32 %v949, 0.0
    %v1210 = vmax.f32 %v1020, 0.0
    %v1211 = vmax.f32 %v1022, 0.0
    %v1212 = vmax.f32 %v1093, 0.0
    %v1213 = vmax.f32 %v1095, 0.0
    %v1214 = vmax.f32 %v1166, 0.0
    %v1215 = vmax.f32 %v1168, 0.0
    %v1216 = vmax.f32 %v953, 0.0
    %v1217 = vmax.f32 %v955, 0.0
    %v1218 = vmax.f32 %v1026, 0.0
    %v1219 = vmax.f32 %v1028, 0.0
    %v1220 = vmax.f32 %v1099, 0.0
    %v1221 = vmax.f32 %v1101, 0.0
    %v1222 = vmax.f32 %v1172, 0.0
    %v1223 = vmax.f32 %v1174, 0.0
    %v1224 = vmax.f32 %v957, 0.0
    %v1225 = vmax.f32 %v959, 0.0
    %v1226 = vmax.f32 %v1030, 0.0
    %v1227 = vmax.f32 %v1032, 0.0
    %v1228 = vmax.f32 %v1103, 0.0
    %v1229 = vmax.f32 %v1105, 0.0
    %v1230 = vmax.f32 %v1176, 0.0
    %v1231 = vmax.f32 %v1178, 0.0
    %v1232 = vmax.f32 %v963, 0.0
    %v1233 = vmax.f32 %v965, 0.0
    %v1234 = vmax.f32 %v1036, 0.0
    %v1235 = vmax.f32 %v1038, 0.0
    %v1236 = vmax.f32 %v1109, 0.0
    %v1237 = vmax.f32 %v1111, 0.0
    %v1238 = vmax.f32 %v1182, 0.0
    %v1239 = vmax.f32 %v1184, 0.0
    %v1240 = vmax.f32 %v967, 0.0
    %v1241 = vmax.f32 %v969, 0.0
    %v1242 = vmax.f32 %v1040, 0.0
    %v1243 = vmax.f32 %v1042, 0.0
    %v1244 = vmax.f32 %v1113, 0.0
    %v1245 = vmax.f32 %v1115, 0.0
    %v1246 = vmax.f32 %v1186, 0.0
    %v1247 = vmax.f32 %v1188, 0.0
    %v1248 = vmax.f32 %v973, 0.0
    %v1249 = vmax.f32 %v975, 0.0
    %v1250 = vmax.f32 %v1046, 0.0
    %v1251 = vmax.f32 %v1048, 0.0
    %v1252 = vmax.f32 %v1119, 0.0
    %v1253 = vmax.f32 %v1121, 0.0
    %v1254 = vmax.f32 %v1192, 0.0
    %v1255 = vmax.f32 %v1194, 0.0
    %v1256 = vmax.f32 %v977, 0.0
    %v1257 = vmax.f32 %v979, 0.0
    %v1258 = vmax.f32 %v1050, 0.0
    %v1259 = vmax.f32 %v1052, 0.0
    %v1260 = vmax.f32 %v1123, 0.0
    %v1261 = vmax.f32 %v1125, 0.0
    %v1262 = vmax.f32 %v1196, 0.0
    %v1263 = vmax.f32 %v1198, 0.0
    %v1264 = vpack.c.bf16 %v1208, %v1200
    %v1265 = vpack.c.bf16 %v1209, %v1201
    %v1266 = vpack.c.bf16 %v1210, %v1202
    %v1267 = vpack.c.bf16 %v1211, %v1203
    %v1268 = vpack.c.bf16 %v1212, %v1204
    %v1269 = vpack.c.bf16 %v1213, %v1205
    %v1270 = vpack.c.bf16 %v1214, %v1206
    %v1271 = vpack.c.bf16 %v1215, %v1207
    %v1272 = vpack.c.bf16 %v1224, %v1216
    %v1273 = vpack.c.bf16 %v1225, %v1217
    %v1274 = vpack.c.bf16 %v1226, %v1218
    %v1275 = vpack.c.bf16 %v1227, %v1219
    %v1276 = vpack.c.bf16 %v1228, %v1220
    %v1277 = vpack.c.bf16 %v1229, %v1221
    %v1278 = vpack.c.bf16 %v1230, %v1222
    %v1279 = vpack.c.bf16 %v1231, %v1223
    %v1280 = vpack.c.bf16 %v1240, %v1232
    %v1281 = vpack.c.bf16 %v1241, %v1233
    %v1282 = vpack.c.bf16 %v1242, %v1234
    %v1283 = vpack.c.bf16 %v1243, %v1235
    %v1284 = vpack.c.bf16 %v1244, %v1236
    %v1285 = vpack.c.bf16 %v1245, %v1237
    %v1286 = vpack.c.bf16 %v1246, %v1238
    %v1287 = vpack.c.bf16 %v1247, %v1239
    %v1288 = vpack.c.bf16 %v1256, %v1248
    %v1289 = vpack.c.bf16 %v1257, %v1249
    %v1290 = vpack.c.bf16 %v1258, %v1250
    %v1291 = vpack.c.bf16 %v1259, %v1251
    %v1292 = vpack.c.bf16 %v1260, %v1252
    %v1293 = vpack.c.bf16 %v1261, %v1253
    %v1294 = vpack.c.bf16 %v1262, %v1254
    %v1295 = vpack.c.bf16 %v1263, %v1255
    %v1296 = vld [vmem:[#allocation8] sm:$0xff]
    %v1297 = vld [vmem:[#allocation8 + $0x8] sm:$0xff]
    %v1298 = vld [vmem:[#allocation8 + $0x10] sm:$0xff]
    %v1299 = vld [vmem:[#allocation8 + $0x18] sm:$0xff]
    %v1300 = vld [vmem:[#allocation8 + $0x20] sm:$0xff]
    %v1301 = vld [vmem:[#allocation8 + $0x28] sm:$0xff]
    %v1302 = vld [vmem:[#allocation8 + $0x30] sm:$0xff]
    %v1303 = vld [vmem:[#allocation8 + $0x38] sm:$0xff]
    %v1304 = vld [vmem:[#allocation8 + $0x40] sm:$0xff]
    %v1305 = vld [vmem:[#allocation8 + $0x48] sm:$0xff]
    %v1306 = vld [vmem:[#allocation8 + $0x50] sm:$0xff]
    %v1307 = vld [vmem:[#allocation8 + $0x58] sm:$0xff]
    %v1308 = vld [vmem:[#allocation8 + $0x60] sm:$0xff]
    %v1309 = vld [vmem:[#allocation8 + $0x68] sm:$0xff]
    %v1310 = vld [vmem:[#allocation8 + $0x70] sm:$0xff]
    %v1311 = vld [vmem:[#allocation8 + $0x78] sm:$0xff]
    %v1312 = vld [vmem:[#allocation8 + $0x80] sm:$0xff]
    %v1313 = vld [vmem:[#allocation8 + $0x88] sm:$0xff]
    %v1314 = vld [vmem:[#allocation8 + $0x90] sm:$0xff]
    %v1315 = vld [vmem:[#allocation8 + $0x98] sm:$0xff]
    %v1316 = vld [vmem:[#allocation8 + $0xa0] sm:$0xff]
    %v1317 = vld [vmem:[#allocation8 + $0xa8] sm:$0xff]
    %v1318 = vld [vmem:[#allocation8 + $0xb0] sm:$0xff]
    %v1319 = vld [vmem:[#allocation8 + $0xb8] sm:$0xff]
    %v1320 = vld [vmem:[#allocation8 + $0xc0] sm:$0xff]
    %v1321 = vld [vmem:[#allocation8 + $0xc8] sm:$0xff]
    %v1322 = vld [vmem:[#allocation8 + $0xd0] sm:$0xff]
    %v1323 = vld [vmem:[#allocation8 + $0xd8] sm:$0xff]
    %v1324 = vld [vmem:[#allocation8 + $0xe0] sm:$0xff]
    %v1325 = vld [vmem:[#allocation8 + $0xe8] sm:$0xff]
    %v1326 = vld [vmem:[#allocation8 + $0xf0] sm:$0xff]
    %v1327 = vld [vmem:[#allocation8 + $0xf8] sm:$0xff]
    %v1328 = vld [vmem:[#allocation8 + $0x100] sm:$0xff]
    %v1329 = vld [vmem:[#allocation8 + $0x108] sm:$0xff]
    %v1330 = vld [vmem:[#allocation8 + $0x110] sm:$0xff]
    %v1331 = vld [vmem:[#allocation8 + $0x118] sm:$0xff]
    %v1332 = vld [vmem:[#allocation8 + $0x120] sm:$0xff]
    %v1333 = vld [vmem:[#allocation8 + $0x128] sm:$0xff]
    %v1334 = vld [vmem:[#allocation8 + $0x130] sm:$0xff]
    %v1335 = vld [vmem:[#allocation8 + $0x138] sm:$0xff]
    %v1336 = vld [vmem:[#allocation8 + $0x140] sm:$0xff]
    %v1337 = vld [vmem:[#allocation8 + $0x148] sm:$0xff]
    %v1338 = vld [vmem:[#allocation8 + $0x150] sm:$0xff]
    %v1339 = vld [vmem:[#allocation8 + $0x158] sm:$0xff]
    %v1340 = vld [vmem:[#allocation8 + $0x160] sm:$0xff]
    %v1341 = vld [vmem:[#allocation8 + $0x168] sm:$0xff]
    %v1342 = vld [vmem:[#allocation8 + $0x170] sm:$0xff]
    %v1343 = vld [vmem:[#allocation8 + $0x178] sm:$0xff]
    %v1344 = vld [vmem:[#allocation8 + $0x180] sm:$0xff]
    %v1345 = vld [vmem:[#allocation8 + $0x188] sm:$0xff]
    %v1346 = vld [vmem:[#allocation8 + $0x190] sm:$0xff]
    %v1347 = vld [vmem:[#allocation8 + $0x198] sm:$0xff]
    %v1348 = vld [vmem:[#allocation8 + $0x1a0] sm:$0xff]
    %v1349 = vld [vmem:[#allocation8 + $0x1a8] sm:$0xff]
    %v1350 = vld [vmem:[#allocation8 + $0x1b0] sm:$0xff]
    %v1351 = vld [vmem:[#allocation8 + $0x1b8] sm:$0xff]
    %v1352 = vld [vmem:[#allocation8 + $0x1c0] sm:$0xff]
    %v1353 = vld [vmem:[#allocation8 + $0x1c8] sm:$0xff]
    %v1354 = vld [vmem:[#allocation8 + $0x1d0] sm:$0xff]
    %v1355 = vld [vmem:[#allocation8 + $0x1d8] sm:$0xff]
    %v1356 = vld [vmem:[#allocation8 + $0x1e0] sm:$0xff]
    %v1357 = vld [vmem:[#allocation8 + $0x1e8] sm:$0xff]
    %v1358 = vld [vmem:[#allocation8 + $0x1f0] sm:$0xff]
    %v1359 = vld [vmem:[#allocation8 + $0x1f8] sm:$0xff]
    %v1360 = vld [vmem:[#allocation8 + $0x200] sm:$0xff]
    %v1361 = vld [vmem:[#allocation8 + $0x208] sm:$0xff]
    %v1362 = vld [vmem:[#allocation8 + $0x210] sm:$0xff]
    %v1363 = vld [vmem:[#allocation8 + $0x218] sm:$0xff]
    %v1364 = vld [vmem:[#allocation8 + $0x220] sm:$0xff]
    %v1365 = vld [vmem:[#allocation8 + $0x228] sm:$0xff]
    %v1366 = vld [vmem:[#allocation8 + $0x230] sm:$0xff]
    %v1367 = vld [vmem:[#allocation8 + $0x238] sm:$0xff]
    %v1368 = vld [vmem:[#allocation8 + $0x240] sm:$0xff]
    %v1369 = vld [vmem:[#allocation8 + $0x248] sm:$0xff]
    %v1370 = vld [vmem:[#allocation8 + $0x250] sm:$0xff]
    %v1371 = vld [vmem:[#allocation8 + $0x258] sm:$0xff]
    %v1372 = vld [vmem:[#allocation8 + $0x260] sm:$0xff]
    %v1373 = vld [vmem:[#allocation8 + $0x268] sm:$0xff]
    %v1374 = vld [vmem:[#allocation8 + $0x270] sm:$0xff]
    %v1375 = vld [vmem:[#allocation8 + $0x278] sm:$0xff]
    %v1376 = vld [vmem:[#allocation8 + $0x280] sm:$0xff]
    %v1377 = vld [vmem:[#allocation8 + $0x288] sm:$0xff]
    %v1378 = vld [vmem:[#allocation8 + $0x290] sm:$0xff]
    %v1379 = vld [vmem:[#allocation8 + $0x298] sm:$0xff]
    %v1380 = vld [vmem:[#allocation8 + $0x2a0] sm:$0xff]
    %v1381 = vld [vmem:[#allocation8 + $0x2a8] sm:$0xff]
    %v1382 = vld [vmem:[#allocation8 + $0x2b0] sm:$0xff]
    %v1383 = vld [vmem:[#allocation8 + $0x2b8] sm:$0xff]
    %v1384 = vld [vmem:[#allocation8 + $0x2c0] sm:$0xff]
    %v1385 = vld [vmem:[#allocation8 + $0x2c8] sm:$0xff]
    %v1386 = vld [vmem:[#allocation8 + $0x2d0] sm:$0xff]
    %v1387 = vld [vmem:[#allocation8 + $0x2d8] sm:$0xff]
    %v1388 = vld [vmem:[#allocation8 + $0x2e0] sm:$0xff]
    %v1389 = vld [vmem:[#allocation8 + $0x2e8] sm:$0xff]
    %v1390 = vld [vmem:[#allocation8 + $0x2f0] sm:$0xff]
    %v1391 = vld [vmem:[#allocation8 + $0x2f8] sm:$0xff]
    %v1392 = vld [vmem:[#allocation8 + $0x300] sm:$0xff]
    %v1393 = vld [vmem:[#allocation8 + $0x308] sm:$0xff]
    %v1394 = vld [vmem:[#allocation8 + $0x310] sm:$0xff]
    %v1395 = vld [vmem:[#allocation8 + $0x318] sm:$0xff]
    %v1396 = vld [vmem:[#allocation8 + $0x320] sm:$0xff]
    %v1397 = vld [vmem:[#allocation8 + $0x328] sm:$0xff]
    %v1398 = vld [vmem:[#allocation8 + $0x330] sm:$0xff]
    %v1399 = vld [vmem:[#allocation8 + $0x338] sm:$0xff]
    %v1400 = vld [vmem:[#allocation8 + $0x340] sm:$0xff]
    %v1401 = vld [vmem:[#allocation8 + $0x348] sm:$0xff]
    %v1402 = vld [vmem:[#allocation8 + $0x350] sm:$0xff]
    %v1403 = vld [vmem:[#allocation8 + $0x358] sm:$0xff]
    %v1404 = vld [vmem:[#allocation8 + $0x360] sm:$0xff]
    %v1405 = vld [vmem:[#allocation8 + $0x368] sm:$0xff]
    %v1406 = vld [vmem:[#allocation8 + $0x370] sm:$0xff]
    %v1407 = vld [vmem:[#allocation8 + $0x378] sm:$0xff]
    %v1408 = vld [vmem:[#allocation8 + $0x380] sm:$0xff]
    %v1409 = vld [vmem:[#allocation8 + $0x388] sm:$0xff]
    %v1410 = vld [vmem:[#allocation8 + $0x390] sm:$0xff]
    %v1411 = vld [vmem:[#allocation8 + $0x398] sm:$0xff]
    %v1412 = vld [vmem:[#allocation8 + $0x3a0] sm:$0xff]
    %v1413 = vld [vmem:[#allocation8 + $0x3a8] sm:$0xff]
    %v1414 = vld [vmem:[#allocation8 + $0x3b0] sm:$0xff]
    %v1415 = vld [vmem:[#allocation8 + $0x3b8] sm:$0xff]
    %v1416 = vld [vmem:[#allocation8 + $0x3c0] sm:$0xff]
    %v1417 = vld [vmem:[#allocation8 + $0x3c8] sm:$0xff]
    %v1418 = vld [vmem:[#allocation8 + $0x3d0] sm:$0xff]
    %v1419 = vld [vmem:[#allocation8 + $0x3d8] sm:$0xff]
    %v1420 = vld [vmem:[#allocation8 + $0x3e0] sm:$0xff]
    %v1421 = vld [vmem:[#allocation8 + $0x3e8] sm:$0xff]
    %v1422 = vld [vmem:[#allocation8 + $0x3f0] sm:$0xff]
    %v1423 = vld [vmem:[#allocation8 + $0x3f8] sm:$0xff]
    %v1552 = vunpack.c.l.b16 %v1296
    %v1553 = vunpack.c.h.b16 %v1296
    %v1554 = vunpack.c.l.b16 %v1297
    %v1555 = vunpack.c.h.b16 %v1297
    %v1556 = vunpack.c.l.b16 %v1298
    %v1557 = vunpack.c.h.b16 %v1298
    %v1558 = vunpack.c.l.b16 %v1299
    %v1559 = vunpack.c.h.b16 %v1299
    %v1560 = vunpack.c.l.b16 %v1300
    %v1561 = vunpack.c.h.b16 %v1300
    %v1562 = vunpack.c.l.b16 %v1301
    %v1563 = vunpack.c.h.b16 %v1301
    %v1564 = vunpack.c.l.b16 %v1302
    %v1565 = vunpack.c.h.b16 %v1302
    %v1566 = vunpack.c.l.b16 %v1303
    %v1567 = vunpack.c.h.b16 %v1303
    %v1568 = vunpack.c.l.b16 %v1304
    %v1569 = vunpack.c.h.b16 %v1304
    %v1570 = vunpack.c.l.b16 %v1305
    %v1571 = vunpack.c.h.b16 %v1305
    %v1572 = vunpack.c.l.b16 %v1306
    %v1573 = vunpack.c.h.b16 %v1306
    %v1574 = vunpack.c.l.b16 %v1307
    %v1575 = vunpack.c.h.b16 %v1307
    %v1576 = vunpack.c.l.b16 %v1308
    %v1577 = vunpack.c.h.b16 %v1308
    %v1578 = vunpack.c.l.b16 %v1309
    %v1579 = vunpack.c.h.b16 %v1309
    %v1580 = vunpack.c.l.b16 %v1310
    %v1581 = vunpack.c.h.b16 %v1310
    %v1582 = vunpack.c.l.b16 %v1311
    %v1583 = vunpack.c.h.b16 %v1311
    %v1584 = vunpack.c.l.b16 %v1312
    %v1585 = vunpack.c.h.b16 %v1312
    %v1586 = vunpack.c.l.b16 %v1313
    %v1587 = vunpack.c.h.b16 %v1313
    %v1588 = vunpack.c.l.b16 %v1314
    %v1589 = vunpack.c.h.b16 %v1314
    %v1590 = vunpack.c.l.b16 %v1315
    %v1591 = vunpack.c.h.b16 %v1315
    %v1592 = vunpack.c.l.b16 %v1316
    %v1593 = vunpack.c.h.b16 %v1316
    %v1594 = vunpack.c.l.b16 %v1317
    %v1595 = vunpack.c.h.b16 %v1317
    %v1596 = vunpack.c.l.b16 %v1318
    %v1597 = vunpack.c.h.b16 %v1318
    %v1598 = vunpack.c.l.b16 %v1319
    %v1599 = vunpack.c.h.b16 %v1319
    %v1600 = vunpack.c.l.b16 %v1320
    %v1601 = vunpack.c.h.b16 %v1320
    %v1602 = vunpack.c.l.b16 %v1321
    %v1603 = vunpack.c.h.b16 %v1321
    %v1604 = vunpack.c.l.b16 %v1322
    %v1605 = vunpack.c.h.b16 %v1322
    %v1606 = vunpack.c.l.b16 %v1323
    %v1607 = vunpack.c.h.b16 %v1323
    %v1608 = vunpack.c.l.b16 %v1324
    %v1609 = vunpack.c.h.b16 %v1324
    %v1610 = vunpack.c.l.b16 %v1325
    %v1611 = vunpack.c.h.b16 %v1325
    %v1612 = vunpack.c.l.b16 %v1326
    %v1613 = vunpack.c.h.b16 %v1326
    %v1614 = vunpack.c.l.b16 %v1327
    %v1615 = vunpack.c.h.b16 %v1327
    %v1616 = vunpack.c.l.b16 %v1328
    %v1617 = vunpack.c.h.b16 %v1328
    %v1618 = vunpack.c.l.b16 %v1329
    %v1619 = vunpack.c.h.b16 %v1329
    %v1620 = vunpack.c.l.b16 %v1330
    %v1621 = vunpack.c.h.b16 %v1330
    %v1622 = vunpack.c.l.b16 %v1331
    %v1623 = vunpack.c.h.b16 %v1331
    %v1624 = vunpack.c.l.b16 %v1332
    %v1625 = vunpack.c.h.b16 %v1332
    %v1626 = vunpack.c.l.b16 %v1333
    %v1627 = vunpack.c.h.b16 %v1333
    %v1628 = vunpack.c.l.b16 %v1334
    %v1629 = vunpack.c.h.b16 %v1334
    %v1630 = vunpack.c.l.b16 %v1335
    %v1631 = vunpack.c.h.b16 %v1335
    %v1632 = vunpack.c.l.b16 %v1336
    %v1633 = vunpack.c.h.b16 %v1336
    %v1634 = vunpack.c.l.b16 %v1337
    %v1635 = vunpack.c.h.b16 %v1337
    %v1636 = vunpack.c.l.b16 %v1338
    %v1637 = vunpack.c.h.b16 %v1338
    %v1638 = vunpack.c.l.b16 %v1339
    %v1639 = vunpack.c.h.b16 %v1339
    %v1640 = vunpack.c.l.b16 %v1340
    %v1641 = vunpack.c.h.b16 %v1340
    %v1642 = vunpack.c.l.b16 %v1341
    %v1643 = vunpack.c.h.b16 %v1341
    %v1644 = vunpack.c.l.b16 %v1342
    %v1645 = vunpack.c.h.b16 %v1342
    %v1646 = vunpack.c.l.b16 %v1343
    %v1647 = vunpack.c.h.b16 %v1343
    %v1648 = vunpack.c.l.b16 %v1344
    %v1649 = vunpack.c.h.b16 %v1344
    %v1650 = vunpack.c.l.b16 %v1345
    %v1651 = vunpack.c.h.b16 %v1345
    %v1652 = vunpack.c.l.b16 %v1346
    %v1653 = vunpack.c.h.b16 %v1346
    %v1654 = vunpack.c.l.b16 %v1347
    %v1655 = vunpack.c.h.b16 %v1347
    %v1656 = vunpack.c.l.b16 %v1348
    %v1657 = vunpack.c.h.b16 %v1348
    %v1658 = vunpack.c.l.b16 %v1349
    %v1659 = vunpack.c.h.b16 %v1349
    %v1660 = vunpack.c.l.b16 %v1350
    %v1661 = vunpack.c.h.b16 %v1350
    %v1662 = vunpack.c.l.b16 %v1351
    %v1663 = vunpack.c.h.b16 %v1351
    %v1664 = vunpack.c.l.b16 %v1352
    %v1665 = vunpack.c.h.b16 %v1352
    %v1666 = vunpack.c.l.b16 %v1353
    %v1667 = vunpack.c.h.b16 %v1353
    %v1668 = vunpack.c.l.b16 %v1354
    %v1669 = vunpack.c.h.b16 %v1354
    %v1670 = vunpack.c.l.b16 %v1355
    %v1671 = vunpack.c.h.b16 %v1355
    %v1672 = vunpack.c.l.b16 %v1356
    %v1673 = vunpack.c.h.b16 %v1356
    %v1674 = vunpack.c.l.b16 %v1357
    %v1675 = vunpack.c.h.b16 %v1357
    %v1676 = vunpack.c.l.b16 %v1358
    %v1677 = vunpack.c.h.b16 %v1358
    %v1678 = vunpack.c.l.b16 %v1359
    %v1679 = vunpack.c.h.b16 %v1359
    %v1680 = vunpack.c.l.b16 %v1360
    %v1681 = vunpack.c.h.b16 %v1360
    %v1682 = vunpack.c.l.b16 %v1361
    %v1683 = vunpack.c.h.b16 %v1361
    %v1684 = vunpack.c.l.b16 %v1362
    %v1685 = vunpack.c.h.b16 %v1362
    %v1686 = vunpack.c.l.b16 %v1363
    %v1687 = vunpack.c.h.b16 %v1363
    %v1688 = vunpack.c.l.b16 %v1364
    %v1689 = vunpack.c.h.b16 %v1364
    %v1690 = vunpack.c.l.b16 %v1365
    %v1691 = vunpack.c.h.b16 %v1365
    %v1692 = vunpack.c.l.b16 %v1366
    %v1693 = vunpack.c.h.b16 %v1366
    %v1694 = vunpack.c.l.b16 %v1367
    %v1695 = vunpack.c.h.b16 %v1367
    %v1696 = vunpack.c.l.b16 %v1368
    %v1697 = vunpack.c.h.b16 %v1368
    %v1698 = vunpack.c.l.b16 %v1369
    %v1699 = vunpack.c.h.b16 %v1369
    %v1700 = vunpack.c.l.b16 %v1370
    %v1701 = vunpack.c.h.b16 %v1370
    %v1702 = vunpack.c.l.b16 %v1371
    %v1703 = vunpack.c.h.b16 %v1371
    %v1704 = vunpack.c.l.b16 %v1372
    %v1705 = vunpack.c.h.b16 %v1372
    %v1706 = vunpack.c.l.b16 %v1373
    %v1707 = vunpack.c.h.b16 %v1373
    %v1708 = vunpack.c.l.b16 %v1374
    %v1709 = vunpack.c.h.b16 %v1374
    %v1710 = vunpack.c.l.b16 %v1375
    %v1711 = vunpack.c.h.b16 %v1375
    %v1712 = vunpack.c.l.b16 %v1376
    %v1713 = vunpack.c.h.b16 %v1376
    %v1714 = vunpack.c.l.b16 %v1377
    %v1715 = vunpack.c.h.b16 %v1377
    %v1716 = vunpack.c.l.b16 %v1378
    %v1717 = vunpack.c.h.b16 %v1378
    %v1718 = vunpack.c.l.b16 %v1379
    %v1719 = vunpack.c.h.b16 %v1379
    %v1720 = vunpack.c.l.b16 %v1380
    %v1721 = vunpack.c.h.b16 %v1380
    %v1722 = vunpack.c.l.b16 %v1381
    %v1723 = vunpack.c.h.b16 %v1381
    %v1724 = vunpack.c.l.b16 %v1382
    %v1725 = vunpack.c.h.b16 %v1382
    %v1726 = vunpack.c.l.b16 %v1383
    %v1727 = vunpack.c.h.b16 %v1383
    %v1728 = vunpack.c.l.b16 %v1384
    %v1729 = vunpack.c.h.b16 %v1384
    %v1730 = vunpack.c.l.b16 %v1385
    %v1731 = vunpack.c.h.b16 %v1385
    %v1732 = vunpack.c.l.b16 %v1386
    %v1733 = vunpack.c.h.b16 %v1386
    %v1734 = vunpack.c.l.b16 %v1387
    %v1735 = vunpack.c.h.b16 %v1387
    %v1736 = vunpack.c.l.b16 %v1388
    %v1737 = vunpack.c.h.b16 %v1388
    %v1738 = vunpack.c.l.b16 %v1389
    %v1739 = vunpack.c.h.b16 %v1389
    %v1740 = vunpack.c.l.b16 %v1390
    %v1741 = vunpack.c.h.b16 %v1390
    %v1742 = vunpack.c.l.b16 %v1391
    %v1743 = vunpack.c.h.b16 %v1391
    %v1744 = vunpack.c.l.b16 %v1392
    %v1745 = vunpack.c.h.b16 %v1392
    %v1746 = vunpack.c.l.b16 %v1393
    %v1747 = vunpack.c.h.b16 %v1393
    %v1748 = vunpack.c.l.b16 %v1394
    %v1749 = vunpack.c.h.b16 %v1394
    %v1750 = vunpack.c.l.b16 %v1395
    %v1751 = vunpack.c.h.b16 %v1395
    %v1752 = vunpack.c.l.b16 %v1396
    %v1753 = vunpack.c.h.b16 %v1396
    %v1754 = vunpack.c.l.b16 %v1397
    %v1755 = vunpack.c.h.b16 %v1397
    %v1756 = vunpack.c.l.b16 %v1398
    %v1757 = vunpack.c.h.b16 %v1398
    %v1758 = vunpack.c.l.b16 %v1399
    %v1759 = vunpack.c.h.b16 %v1399
    %v1760 = vunpack.c.l.b16 %v1400
    %v1761 = vunpack.c.h.b16 %v1400
    %v1762 = vunpack.c.l.b16 %v1401
    %v1763 = vunpack.c.h.b16 %v1401
    %v1764 = vunpack.c.l.b16 %v1402
    %v1765 = vunpack.c.h.b16 %v1402
    %v1766 = vunpack.c.l.b16 %v1403
    %v1767 = vunpack.c.h.b16 %v1403
    %v1768 = vunpack.c.l.b16 %v1404
    %v1769 = vunpack.c.h.b16 %v1404
    %v1770 = vunpack.c.l.b16 %v1405
    %v1771 = vunpack.c.h.b16 %v1405
    %v1772 = vunpack.c.l.b16 %v1406
    %v1773 = vunpack.c.h.b16 %v1406
    %v1774 = vunpack.c.l.b16 %v1407
    %v1775 = vunpack.c.h.b16 %v1407
    %v1776 = vunpack.c.l.b16 %v1408
    %v1777 = vunpack.c.h.b16 %v1408
    %v1778 = vunpack.c.l.b16 %v1409
    %v1779 = vunpack.c.h.b16 %v1409
    %v1780 = vunpack.c.l.b16 %v1410
    %v1781 = vunpack.c.h.b16 %v1410
    %v1782 = vunpack.c.l.b16 %v1411
    %v1783 = vunpack.c.h.b16 %v1411
    %v1784 = vunpack.c.l.b16 %v1412
    %v1785 = vunpack.c.h.b16 %v1412
    %v1786 = vunpack.c.l.b16 %v1413
    %v1787 = vunpack.c.h.b16 %v1413
    %v1788 = vunpack.c.l.b16 %v1414
    %v1789 = vunpack.c.h.b16 %v1414
    %v1790 = vunpack.c.l.b16 %v1415
    %v1791 = vunpack.c.h.b16 %v1415
    %v1792 = vunpack.c.l.b16 %v1416
    %v1793 = vunpack.c.h.b16 %v1416
    %v1794 = vunpack.c.l.b16 %v1417
    %v1795 = vunpack.c.h.b16 %v1417
    %v1796 = vunpack.c.l.b16 %v1418
    %v1797 = vunpack.c.h.b16 %v1418
    %v1798 = vunpack.c.l.b16 %v1419
    %v1799 = vunpack.c.h.b16 %v1419
    %v1800 = vunpack.c.l.b16 %v1420
    %v1801 = vunpack.c.h.b16 %v1420
    %v1802 = vunpack.c.l.b16 %v1421
    %v1803 = vunpack.c.h.b16 %v1421
    %v1804 = vunpack.c.l.b16 %v1422
    %v1805 = vunpack.c.h.b16 %v1422
    %v1806 = vunpack.c.l.b16 %v1423
    %v1807 = vunpack.c.h.b16 %v1423
    %v1808 = vpack.c.b16 %v1554, %v1552
    %v1809 = vpack.c.b16 %v1555, %v1553
    %v1810 = vpack.c.b16 %v1558, %v1556
    %v1811 = vpack.c.b16 %v1559, %v1557
    %v1812 = vpack.c.b16 %v1562, %v1560
    %v1813 = vpack.c.b16 %v1563, %v1561
    %v1814 = vpack.c.b16 %v1566, %v1564
    %v1815 = vpack.c.b16 %v1567, %v1565
    %v1816 = vpack.c.b16 %v1570, %v1568
    %v1817 = vpack.c.b16 %v1571, %v1569
    %v1818 = vpack.c.b16 %v1574, %v1572
    %v1819 = vpack.c.b16 %v1575, %v1573
    %v1820 = vpack.c.b16 %v1578, %v1576
    %v1821 = vpack.c.b16 %v1579, %v1577
    %v1822 = vpack.c.b16 %v1582, %v1580
    %v1823 = vpack.c.b16 %v1583, %v1581
    %v1824 = vpack.c.b16 %v1586, %v1584
    %v1825 = vpack.c.b16 %v1587, %v1585
    %v1826 = vpack.c.b16 %v1590, %v1588
    %v1827 = vpack.c.b16 %v1591, %v1589
    %v1828 = vpack.c.b16 %v1594, %v1592
    %v1829 = vpack.c.b16 %v1595, %v1593
    %v1830 = vpack.c.b16 %v1598, %v1596
    %v1831 = vpack.c.b16 %v1599, %v1597
    %v1832 = vpack.c.b16 %v1602, %v1600
    %v1833 = vpack.c.b16 %v1603, %v1601
    %v1834 = vpack.c.b16 %v1606, %v1604
    %v1835 = vpack.c.b16 %v1607, %v1605
    %v1836 = vpack.c.b16 %v1610, %v1608
    %v1837 = vpack.c.b16 %v1611, %v1609
    %v1838 = vpack.c.b16 %v1614, %v1612
    %v1839 = vpack.c.b16 %v1615, %v1613
    %v1840 = vpack.c.b16 %v1618, %v1616
    %v1841 = vpack.c.b16 %v1619, %v1617
    %v1842 = vpack.c.b16 %v1622, %v1620
    %v1843 = vpack.c.b16 %v1623, %v1621
    %v1844 = vpack.c.b16 %v1626, %v1624
    %v1845 = vpack.c.b16 %v1627, %v1625
    %v1846 = vpack.c.b16 %v1630, %v1628
    %v1847 = vpack.c.b16 %v1631, %v1629
    %v1848 = vpack.c.b16 %v1634, %v1632
    %v1849 = vpack.c.b16 %v1635, %v1633
    %v1850 = vpack.c.b16 %v1638, %v1636
    %v1851 = vpack.c.b16 %v1639, %v1637
    %v1852 = vpack.c.b16 %v1642, %v1640
    %v1853 = vpack.c.b16 %v1643, %v1641
    %v1854 = vpack.c.b16 %v1646, %v1644
    %v1855 = vpack.c.b16 %v1647, %v1645
    %v1856 = vpack.c.b16 %v1650, %v1648
    %v1857 = vpack.c.b16 %v1651, %v1649
    %v1858 = vpack.c.b16 %v1654, %v1652
    %v1859 = vpack.c.b16 %v1655, %v1653
    %v1860 = vpack.c.b16 %v1658, %v1656
    %v1861 = vpack.c.b16 %v1659, %v1657
    %v1862 = vpack.c.b16 %v1662, %v1660
    %v1863 = vpack.c.b16 %v1663, %v1661
    %v1864 = vpack.c.b16 %v1666, %v1664
    %v1865 = vpack.c.b16 %v1667, %v1665
    %v1866 = vpack.c.b16 %v1670, %v1668
    %v1867 = vpack.c.b16 %v1671, %v1669
    %v1868 = vpack.c.b16 %v1674, %v1672
    %v1869 = vpack.c.b16 %v1675, %v1673
    %v1870 = vpack.c.b16 %v1678, %v1676
    %v1871 = vpack.c.b16 %v1679, %v1677
    %v1872 = vpack.c.b16 %v1682, %v1680
    %v1873 = vpack.c.b16 %v1683, %v1681
    %v1874 = vpack.c.b16 %v1686, %v1684
    %v1875 = vpack.c.b16 %v1687, %v1685
    %v1876 = vpack.c.b16 %v1690, %v1688
    %v1877 = vpack.c.b16 %v1691, %v1689
    %v1878 = vpack.c.b16 %v1694, %v1692
    %v1879 = vpack.c.b16 %v1695, %v1693
    %v1880 = vpack.c.b16 %v1698, %v1696
    %v1881 = vpack.c.b16 %v1699, %v1697
    %v1882 = vpack.c.b16 %v1702, %v1700
    %v1883 = vpack.c.b16 %v1703, %v1701
    %v1884 = vpack.c.b16 %v1706, %v1704
    %v1885 = vpack.c.b16 %v1707, %v1705
    %v1886 = vpack.c.b16 %v1710, %v1708
    %v1887 = vpack.c.b16 %v1711, %v1709
    %v1888 = vpack.c.b16 %v1714, %v1712
    %v1889 = vpack.c.b16 %v1715, %v1713
    %v1890 = vpack.c.b16 %v1718, %v1716
    %v1891 = vpack.c.b16 %v1719, %v1717
    %v1892 = vpack.c.b16 %v1722, %v1720
    %v1893 = vpack.c.b16 %v1723, %v1721
    %v1894 = vpack.c.b16 %v1726, %v1724
    %v1895 = vpack.c.b16 %v1727, %v1725
    %v1896 = vpack.c.b16 %v1730, %v1728
    %v1897 = vpack.c.b16 %v1731, %v1729
    %v1898 = vpack.c.b16 %v1734, %v1732
    %v1899 = vpack.c.b16 %v1735, %v1733
    %v1900 = vpack.c.b16 %v1738, %v1736
    %v1901 = vpack.c.b16 %v1739, %v1737
    %v1902 = vpack.c.b16 %v1742, %v1740
    %v1903 = vpack.c.b16 %v1743, %v1741
    %v1904 = vpack.c.b16 %v1746, %v1744
    %v1905 = vpack.c.b16 %v1747, %v1745
    %v1906 = vpack.c.b16 %v1750, %v1748
    %v1907 = vpack.c.b16 %v1751, %v1749
    %v1908 = vpack.c.b16 %v1754, %v1752
    %v1909 = vpack.c.b16 %v1755, %v1753
    %v1910 = vpack.c.b16 %v1758, %v1756
    %v1911 = vpack.c.b16 %v1759, %v1757
    %v1912 = vpack.c.b16 %v1762, %v1760
    %v1913 = vpack.c.b16 %v1763, %v1761
    %v1914 = vpack.c.b16 %v1766, %v1764
    %v1915 = vpack.c.b16 %v1767, %v1765
    %v1916 = vpack.c.b16 %v1770, %v1768
    %v1917 = vpack.c.b16 %v1771, %v1769
    %v1918 = vpack.c.b16 %v1774, %v1772
    %v1919 = vpack.c.b16 %v1775, %v1773
    %v1920 = vpack.c.b16 %v1778, %v1776
    %v1921 = vpack.c.b16 %v1779, %v1777
    %v1922 = vpack.c.b16 %v1782, %v1780
    %v1923 = vpack.c.b16 %v1783, %v1781
    %v1924 = vpack.c.b16 %v1786, %v1784
    %v1925 = vpack.c.b16 %v1787, %v1785
    %v1926 = vpack.c.b16 %v1790, %v1788
    %v1927 = vpack.c.b16 %v1791, %v1789
    %v1928 = vpack.c.b16 %v1794, %v1792
    %v1929 = vpack.c.b16 %v1795, %v1793
    %v1930 = vpack.c.b16 %v1798, %v1796
    %v1931 = vpack.c.b16 %v1799, %v1797
    %v1932 = vpack.c.b16 %v1802, %v1800
    %v1933 = vpack.c.b16 %v1803, %v1801
    %v1934 = vpack.c.b16 %v1806, %v1804
    %v1935 = vpack.c.b16 %v1807, %v1805
    %2064 = vmatprep.subr.bf16.mxu0 %v1823
    %2065 = vmatpush1.bf16.msra.mxu0 %v1822
    %2066 = vmatprep.subr.bf16.mxu0 %v1821
    %2067 = vmatpush1.bf16.msra.mxu0 %v1820
    %2068 = vmatprep.subr.bf16.mxu0 %v1819
    %2069 = vmatpush1.bf16.msra.mxu0 %v1818
    %2070 = vmatprep.subr.bf16.mxu0 %v1817
    %2071 = vmatpush1.bf16.msra.mxu0 %v1816
    %2072 = vmatprep.subr.bf16.mxu0 %v1815
    %2073 = vmatpush1.bf16.msra.mxu0 %v1814
    %2074 = vmatprep.subr.bf16.mxu0 %v1813
    %2075 = vmatpush1.bf16.msra.mxu0 %v1812
    %2076 = vmatprep.subr.bf16.mxu0 %v1811
    %2077 = vmatpush1.bf16.msra.mxu0 %v1810
    %2078 = vmatprep.subr.bf16.mxu0 %v1809
    %2079 = vmatpush1.bf16.msra.mxu0 %v1808
    %2080 = vmatprep.subr.bf16.mxu0 %v1839
    %2081 = vmatpush2.bf16.msra.mxu0 %v1838
    %2082 = vmatprep.subr.bf16.mxu0 %v1837
    %2083 = vmatpush2.bf16.msra.mxu0 %v1836
    %2084 = vmatprep.subr.bf16.mxu0 %v1835
    %2085 = vmatpush2.bf16.msra.mxu0 %v1834
    %2086 = vmatprep.subr.bf16.mxu0 %v1833
    %2087 = vmatpush2.bf16.msra.mxu0 %v1832
    %2088 = vmatprep.subr.bf16.mxu0 %v1831
    %2089 = vmatpush2.bf16.msra.mxu0 %v1830
    %2090 = vmatprep.subr.bf16.mxu0 %v1829
    %2091 = vmatpush2.bf16.msra.mxu0 %v1828
    %2092 = vmatprep.subr.bf16.mxu0 %v1827
    %2093 = vmatpush2.bf16.msra.mxu0 %v1826
    %2094 = vmatprep.subr.bf16.mxu0 %v1825
    %2095 = vmatpush2.bf16.msra.mxu0 %v1824
    %2096 = vmatprep.mubr.bf16.mxu0 %v1265
    %2097 = vmatmul.mubr.bf16.gmra.mxu0 %v1264
    %v2098 = vpop.f32.mrf.mxu0
    %v2099 = vadd.f32 0.0, %v2098
    %v2100 = vpop.f32.mrf.mxu0
    %v2101 = vadd.f32 0.0, %v2100
    %v2102 = vpop.f32.mrf.mxu0
    %v2103 = vadd.f32 0.0, %v2102
    %v2104 = vpop.f32.mrf.mxu0
    %v2105 = vadd.f32 0.0, %v2104
    %2106 = vmatprep.mubr.bf16.mxu0 %v1273
    %2107 = vmatmul.mubr.bf16.gmra.mxu0 %v1272
    %v2108 = vpop.f32.mrf.mxu0
    %v2109 = vadd.f32 0.0, %v2108
    %v2110 = vpop.f32.mrf.mxu0
    %v2111 = vadd.f32 0.0, %v2110
    %v2112 = vpop.f32.mrf.mxu0
    %v2113 = vadd.f32 0.0, %v2112
    %v2114 = vpop.f32.mrf.mxu0
    %v2115 = vadd.f32 0.0, %v2114
    %2116 = vmatprep.mubr.bf16.mxu0 %v1281
    %2117 = vmatmul.mubr.bf16.gmra.mxu0 %v1280
    %v2118 = vpop.f32.mrf.mxu0
    %v2119 = vadd.f32 0.0, %v2118
    %v2120 = vpop.f32.mrf.mxu0
    %v2121 = vadd.f32 0.0, %v2120
    %v2122 = vpop.f32.mrf.mxu0
    %v2123 = vadd.f32 0.0, %v2122
    %v2124 = vpop.f32.mrf.mxu0
    %v2125 = vadd.f32 0.0, %v2124
    %2126 = vmatprep.mubr.bf16.mxu0 %v1289
    %2127 = vmatmul.mubr.bf16.gmra.mxu0 %v1288
    %v2128 = vpop.f32.mrf.mxu0
    %v2129 = vadd.f32 0.0, %v2128
    %v2130 = vpop.f32.mrf.mxu0
    %v2131 = vadd.f32 0.0, %v2130
    %v2132 = vpop.f32.mrf.mxu0
    %v2133 = vadd.f32 0.0, %v2132
    %v2134 = vpop.f32.mrf.mxu0
    %v2135 = vadd.f32 0.0, %v2134
    %2136 = vdwg.mxu0
    %2137 = vmatprep.subr.bf16.mxu0 %v1855
    %2138 = vmatpush1.bf16.msra.mxu0 %v1854
    %2139 = vmatprep.subr.bf16.mxu0 %v1853
    %2140 = vmatpush1.bf16.msra.mxu0 %v1852
    %2141 = vmatprep.subr.bf16.mxu0 %v1851
    %2142 = vmatpush1.bf16.msra.mxu0 %v1850
    %2143 = vmatprep.subr.bf16.mxu0 %v1849
    %2144 = vmatpush1.bf16.msra.mxu0 %v1848
    %2145 = vmatprep.subr.bf16.mxu0 %v1847
    %2146 = vmatpush1.bf16.msra.mxu0 %v1846
    %2147 = vmatprep.subr.bf16.mxu0 %v1845
    %2148 = vmatpush1.bf16.msra.mxu0 %v1844
    %2149 = vmatprep.subr.bf16.mxu0 %v1843
    %2150 = vmatpush1.bf16.msra.mxu0 %v1842
    %2151 = vmatprep.subr.bf16.mxu0 %v1841
    %2152 = vmatpush1.bf16.msra.mxu0 %v1840
    %2153 = vmatprep.subr.bf16.mxu0 %v1871
    %2154 = vmatpush2.bf16.msra.mxu0 %v1870
    %2155 = vmatprep.subr.bf16.mxu0 %v1869
    %2156 = vmatpush2.bf16.msra.mxu0 %v1868
    %2157 = vmatprep.subr.bf16.mxu0 %v1867
    %2158 = vmatpush2.bf16.msra.mxu0 %v1866
    %2159 = vmatprep.subr.bf16.mxu0 %v1865
    %2160 = vmatpush2.bf16.msra.mxu0 %v1864
    %2161 = vmatprep.subr.bf16.mxu0 %v1863
    %2162 = vmatpush2.bf16.msra.mxu0 %v1862
    %2163 = vmatprep.subr.bf16.mxu0 %v1861
    %2164 = vmatpush2.bf16.msra.mxu0 %v1860
    %2165 = vmatprep.subr.bf16.mxu0 %v1859
    %2166 = vmatpush2.bf16.msra.mxu0 %v1858
    %2167 = vmatprep.subr.bf16.mxu0 %v1857
    %2168 = vmatpush2.bf16.msra.mxu0 %v1856
    %2169 = vmatprep.mubr.bf16.mxu0 %v1267
    %2170 = vmatmul.mubr.bf16.gmra.mxu0 %v1266
    %v2171 = vpop.f32.mrf.mxu0
    %v2172 = vadd.f32 %v2099, %v2171
    %v2173 = vpop.f32.mrf.mxu0
    %v2174 = vadd.f32 %v2101, %v2173
    %v2175 = vpop.f32.mrf.mxu0
    %v2176 = vadd.f32 %v2103, %v2175
    %v2177 = vpop.f32.mrf.mxu0
    %v2178 = vadd.f32 %v2105, %v2177
    %2179 = vmatprep.mubr.bf16.mxu0 %v1275
    %2180 = vmatmul.mubr.bf16.gmra.mxu0 %v1274
    %v2181 = vpop.f32.mrf.mxu0
    %v2182 = vadd.f32 %v2109, %v2181
    %v2183 = vpop.f32.mrf.mxu0
    %v2184 = vadd.f32 %v2111, %v2183
    %v2185 = vpop.f32.mrf.mxu0
    %v2186 = vadd.f32 %v2113, %v2185
    %v2187 = vpop.f32.mrf.mxu0
    %v2188 = vadd.f32 %v2115, %v2187
    %2189 = vmatprep.mubr.bf16.mxu0 %v1283
    %2190 = vmatmul.mubr.bf16.gmra.mxu0 %v1282
    %v2191 = vpop.f32.mrf.mxu0
    %v2192 = vadd.f32 %v2119, %v2191
    %v2193 = vpop.f32.mrf.mxu0
    %v2194 = vadd.f32 %v2121, %v2193
    %v2195 = vpop.f32.mrf.mxu0
    %v2196 = vadd.f32 %v2123, %v2195
    %v2197 = vpop.f32.mrf.mxu0
    %v2198 = vadd.f32 %v2125, %v2197
    %2199 = vmatprep.mubr.bf16.mxu0 %v1291
    %2200 = vmatmul.mubr.bf16.gmra.mxu0 %v1290
    %v2201 = vpop.f32.mrf.mxu0
    %v2202 = vadd.f32 %v2129, %v2201
    %v2203 = vpop.f32.mrf.mxu0
    %v2204 = vadd.f32 %v2131, %v2203
    %v2205 = vpop.f32.mrf.mxu0
    %v2206 = vadd.f32 %v2133, %v2205
    %v2207 = vpop.f32.mrf.mxu0
    %v2208 = vadd.f32 %v2135, %v2207
    %2209 = vdwg.mxu0
    %2210 = vmatprep.subr.bf16.mxu0 %v1887
    %2211 = vmatpush1.bf16.msra.mxu0 %v1886
    %2212 = vmatprep.subr.bf16.mxu0 %v1885
    %2213 = vmatpush1.bf16.msra.mxu0 %v1884
    %2214 = vmatprep.subr.bf16.mxu0 %v1883
    %2215 = vmatpush1.bf16.msra.mxu0 %v1882
    %2216 = vmatprep.subr.bf16.mxu0 %v1881
    %2217 = vmatpush1.bf16.msra.mxu0 %v1880
    %2218 = vmatprep.subr.bf16.mxu0 %v1879
    %2219 = vmatpush1.bf16.msra.mxu0 %v1878
    %2220 = vmatprep.subr.bf16.mxu0 %v1877
    %2221 = vmatpush1.bf16.msra.mxu0 %v1876
    %2222 = vmatprep.subr.bf16.mxu0 %v1875
    %2223 = vmatpush1.bf16.msra.mxu0 %v1874
    %2224 = vmatprep.subr.bf16.mxu0 %v1873
    %2225 = vmatpush1.bf16.msra.mxu0 %v1872
    %2226 = vmatprep.subr.bf16.mxu0 %v1903
    %2227 = vmatpush2.bf16.msra.mxu0 %v1902
    %2228 = vmatprep.subr.bf16.mxu0 %v1901
    %2229 = vmatpush2.bf16.msra.mxu0 %v1900
    %2230 = vmatprep.subr.bf16.mxu0 %v1899
    %2231 = vmatpush2.bf16.msra.mxu0 %v1898
    %2232 = vmatprep.subr.bf16.mxu0 %v1897
    %2233 = vmatpush2.bf16.msra.mxu0 %v1896
    %2234 = vmatprep.subr.bf16.mxu0 %v1895
    %2235 = vmatpush2.bf16.msra.mxu0 %v1894
    %2236 = vmatprep.subr.bf16.mxu0 %v1893
    %2237 = vmatpush2.bf16.msra.mxu0 %v1892
    %2238 = vmatprep.subr.bf16.mxu0 %v1891
    %2239 = vmatpush2.bf16.msra.mxu0 %v1890
    %2240 = vmatprep.subr.bf16.mxu0 %v1889
    %2241 = vmatpush2.bf16.msra.mxu0 %v1888
    %2242 = vmatprep.mubr.bf16.mxu0 %v1269
    %2243 = vmatmul.mubr.bf16.gmra.mxu0 %v1268
    %v2244 = vpop.f32.mrf.mxu0
    %v2245 = vadd.f32 %v2172, %v2244
    %v2246 = vpop.f32.mrf.mxu0
    %v2247 = vadd.f32 %v2174, %v2246
    %v2248 = vpop.f32.mrf.mxu0
    %v2249 = vadd.f32 %v2176, %v2248
    %v2250 = vpop.f32.mrf.mxu0
    %v2251 = vadd.f32 %v2178, %v2250
    %2252 = vmatprep.mubr.bf16.mxu0 %v1277
    %2253 = vmatmul.mubr.bf16.gmra.mxu0 %v1276
    %v2254 = vpop.f32.mrf.mxu0
    %v2255 = vadd.f32 %v2182, %v2254
    %v2256 = vpop.f32.mrf.mxu0
    %v2257 = vadd.f32 %v2184, %v2256
    %v2258 = vpop.f32.mrf.mxu0
    %v2259 = vadd.f32 %v2186, %v2258
    %v2260 = vpop.f32.mrf.mxu0
    %v2261 = vadd.f32 %v2188, %v2260
    %2262 = vmatprep.mubr.bf16.mxu0 %v1285
    %2263 = vmatmul.mubr.bf16.gmra.mxu0 %v1284
    %v2264 = vpop.f32.mrf.mxu0
    %v2265 = vadd.f32 %v2192, %v2264
    %v2266 = vpop.f32.mrf.mxu0
    %v2267 = vadd.f32 %v2194, %v2266
    %v2268 = vpop.f32.mrf.mxu0
    %v2269 = vadd.f32 %v2196, %v2268
    %v2270 = vpop.f32.mrf.mxu0
    %v2271 = vadd.f32 %v2198, %v2270
    %2272 = vmatprep.mubr.bf16.mxu0 %v1293
    %2273 = vmatmul.mubr.bf16.gmra.mxu0 %v1292
    %v2274 = vpop.f32.mrf.mxu0
    %v2275 = vadd.f32 %v2202, %v2274
    %v2276 = vpop.f32.mrf.mxu0
    %v2277 = vadd.f32 %v2204, %v2276
    %v2278 = vpop.f32.mrf.mxu0
    %v2279 = vadd.f32 %v2206, %v2278
    %v2280 = vpop.f32.mrf.mxu0
    %v2281 = vadd.f32 %v2208, %v2280
    %2282 = vdwg.mxu0
    %2283 = vmatprep.subr.bf16.mxu0 %v1919
    %2284 = vmatpush1.bf16.msra.mxu0 %v1918
    %2285 = vmatprep.subr.bf16.mxu0 %v1917
    %2286 = vmatpush1.bf16.msra.mxu0 %v1916
    %2287 = vmatprep.subr.bf16.mxu0 %v1915
    %2288 = vmatpush1.bf16.msra.mxu0 %v1914
    %2289 = vmatprep.subr.bf16.mxu0 %v1913
    %2290 = vmatpush1.bf16.msra.mxu0 %v1912
    %2291 = vmatprep.subr.bf16.mxu0 %v1911
    %2292 = vmatpush1.bf16.msra.mxu0 %v1910
    %2293 = vmatprep.subr.bf16.mxu0 %v1909
    %2294 = vmatpush1.bf16.msra.mxu0 %v1908
    %2295 = vmatprep.subr.bf16.mxu0 %v1907
    %2296 = vmatpush1.bf16.msra.mxu0 %v1906
    %2297 = vmatprep.subr.bf16.mxu0 %v1905
    %2298 = vmatpush1.bf16.msra.mxu0 %v1904
    %2299 = vmatprep.subr.bf16.mxu0 %v1935
    %2300 = vmatpush2.bf16.msra.mxu0 %v1934
    %2301 = vmatprep.subr.bf16.mxu0 %v1933
    %2302 = vmatpush2.bf16.msra.mxu0 %v1932
    %2303 = vmatprep.subr.bf16.mxu0 %v1931
    %2304 = vmatpush2.bf16.msra.mxu0 %v1930
    %2305 = vmatprep.subr.bf16.mxu0 %v1929
    %2306 = vmatpush2.bf16.msra.mxu0 %v1928
    %2307 = vmatprep.subr.bf16.mxu0 %v1927
    %2308 = vmatpush2.bf16.msra.mxu0 %v1926
    %2309 = vmatprep.subr.bf16.mxu0 %v1925
    %2310 = vmatpush2.bf16.msra.mxu0 %v1924
    %2311 = vmatprep.subr.bf16.mxu0 %v1923
    %2312 = vmatpush2.bf16.msra.mxu0 %v1922
    %2313 = vmatprep.subr.bf16.mxu0 %v1921
    %2314 = vmatpush2.bf16.msra.mxu0 %v1920
    %2315 = vmatprep.mubr.bf16.mxu0 %v1271
    %2316 = vmatmul.mubr.bf16.gmra.mxu0 %v1270
    %v2317 = vpop.f32.mrf.mxu0
    %v2318 = vadd.f32 %v2245, %v2317
    %v2319 = vpop.f32.mrf.mxu0
    %v2320 = vadd.f32 %v2247, %v2319
    %v2321 = vpop.f32.mrf.mxu0
    %v2322 = vadd.f32 %v2249, %v2321
    %v2323 = vpop.f32.mrf.mxu0
    %v2324 = vadd.f32 %v2251, %v2323
    %2325 = vmatprep.mubr.bf16.mxu0 %v1279
    %2326 = vmatmul.mubr.bf16.gmra.mxu0 %v1278
    %v2327 = vpop.f32.mrf.mxu0
    %v2328 = vadd.f32 %v2255, %v2327
    %v2329 = vpop.f32.mrf.mxu0
    %v2330 = vadd.f32 %v2257, %v2329
    %v2331 = vpop.f32.mrf.mxu0
    %v2332 = vadd.f32 %v2259, %v2331
    %v2333 = vpop.f32.mrf.mxu0
    %v2334 = vadd.f32 %v2261, %v2333
    %2335 = vmatprep.mubr.bf16.mxu0 %v1287
    %2336 = vmatmul.mubr.bf16.gmra.mxu0 %v1286
    %v2337 = vpop.f32.mrf.mxu0
    %v2338 = vadd.f32 %v2265, %v2337
    %v2339 = vpop.f32.mrf.mxu0
    %v2340 = vadd.f32 %v2267, %v2339
    %v2341 = vpop.f32.mrf.mxu0
    %v2342 = vadd.f32 %v2269, %v2341
    %v2343 = vpop.f32.mrf.mxu0
    %v2344 = vadd.f32 %v2271, %v2343
    %2345 = vmatprep.mubr.bf16.mxu0 %v1295
    %2346 = vmatmul.mubr.bf16.gmra.mxu0 %v1294
    %v2347 = vpop.f32.mrf.mxu0
    %v2348 = vadd.f32 %v2275, %v2347
    %v2349 = vpop.f32.mrf.mxu0
    %v2350 = vadd.f32 %v2277, %v2349
    %v2351 = vpop.f32.mrf.mxu0
    %v2352 = vadd.f32 %v2279, %v2351
    %v2353 = vpop.f32.mrf.mxu0
    %v2354 = vadd.f32 %v2281, %v2353
    %2355 = vdwg.mxu0
    %p2356 = scmp.eq.s32.totalorder 0, 0
    // Predicated region
    $region38: #{tpu_custom_call.1} parent=1 // pred_check
      %p2357 = pneg %p2356
    $region39: #{tpu_custom_call.1} parent=1 // pred_check_branch
      %2359 = sbr.rel (%p2357) target = $region41
    $region40: #{tpu_custom_call.1} parent=1 // pred_region
      %v2360 = vld [vmem:[%s4] sm:$0x3]
      %v2362 = vlaneseq
      %v2363 = vshrl.u32 %v2362, 7
      %v2364 = vsub.s32 0, %v2363
      %v2365 = vrot.slane %v2360, %v2364
      %v2366 = vlaneseq
      %v2367 = vshrl.u32 %v2366, 7
      %v2368 = vsub.s32 1, %v2367
      %v2369 = vrot.slane %v2360, %v2368
      %v2372 = vadd.f32 %v2318, %v2365
      %v2373 = vadd.f32 %v2320, %v2369
      %v2374 = vadd.f32 %v2322, %v2365
      %v2375 = vadd.f32 %v2324, %v2369
      %v2376 = vadd.f32 %v2328, %v2365
      %v2377 = vadd.f32 %v2330, %v2369
      %v2378 = vadd.f32 %v2332, %v2365
      %v2379 = vadd.f32 %v2334, %v2369
      %v2380 = vadd.f32 %v2338, %v2365
      %v2381 = vadd.f32 %v2340, %v2369
      %v2382 = vadd.f32 %v2342, %v2365
      %v2383 = vadd.f32 %v2344, %v2369
      %v2384 = vadd.f32 %v2348, %v2365
      %v2385 = vadd.f32 %v2350, %v2369
      %v2386 = vadd.f32 %v2352, %v2365
      %v2387 = vadd.f32 %v2354, %v2369
      %2388 = vst [vmem:[#allocation10] sm:$0xff] %v2372
      %2389 = vst [vmem:[#allocation10 + $0x8] sm:$0xff] %v2373
      %2390 = vst [vmem:[#allocation10 + $0x10] sm:$0xff] %v2374
      %2391 = vst [vmem:[#allocation10 + $0x18] sm:$0xff] %v2375
      %2392 = vst [vmem:[#allocation10 + $0x20] sm:$0xff] %v2376
      %2393 = vst [vmem:[#allocation10 + $0x28] sm:$0xff] %v2377
      %2394 = vst [vmem:[#allocation10 + $0x30] sm:$0xff] %v2378
      %2395 = vst [vmem:[#allocation10 + $0x38] sm:$0xff] %v2379
      %2396 = vst [vmem:[#allocation10 + $0x40] sm:$0xff] %v2380
      %2397 = vst [vmem:[#allocation10 + $0x48] sm:$0xff] %v2381
      %2398 = vst [vmem:[#allocation10 + $0x50] sm:$0xff] %v2382
      %2399 = vst [vmem:[#allocation10 + $0x58] sm:$0xff] %v2383
      %2400 = vst [vmem:[#allocation10 + $0x60] sm:$0xff] %v2384
      %2401 = vst [vmem:[#allocation10 + $0x68] sm:$0xff] %v2385
      %2402 = vst [vmem:[#allocation10 + $0x70] sm:$0xff] %v2386
      %2403 = vst [vmem:[#allocation10 + $0x78] sm:$0xff] %v2387
    $region41: #{tpu_custom_call.1} parent=1 // pred_fallthru
      _
    %p2404 = scmp.ne.s32.totalorder 0, 0
    // Predicated region
    $region42: #{tpu_custom_call.1} parent=1 // pred_check
      %p2405 = pneg %p2404
    $region43: #{tpu_custom_call.1} parent=1 // pred_check_branch
      %2407 = sbr.rel (%p2405) target = $region45
    $region44: #{tpu_custom_call.1} parent=1 // pred_region
      %v2408 = vld [vmem:[#allocation10] sm:$0xff]
      %v2409 = vld [vmem:[#allocation10 + $0x8] sm:$0xff]
      %v2410 = vld [vmem:[#allocation10 + $0x10] sm:$0xff]
      %v2411 = vld [vmem:[#allocation10 + $0x18] sm:$0xff]
      %v2412 = vld [vmem:[#allocation10 + $0x20] sm:$0xff]
      %v2413 = vld [vmem:[#allocation10 + $0x28] sm:$0xff]
      %v2414 = vld [vmem:[#allocation10 + $0x30] sm:$0xff]
      %v2415 = vld [vmem:[#allocation10 + $0x38] sm:$0xff]
      %v2416 = vld [vmem:[#allocation10 + $0x40] sm:$0xff]
      %v2417 = vld [vmem:[#allocation10 + $0x48] sm:$0xff]
      %v2418 = vld [vmem:[#allocation10 + $0x50] sm:$0xff]
      %v2419 = vld [vmem:[#allocation10 + $0x58] sm:$0xff]
      %v2420 = vld [vmem:[#allocation10 + $0x60] sm:$0xff]
      %v2421 = vld [vmem:[#allocation10 + $0x68] sm:$0xff]
      %v2422 = vld [vmem:[#allocation10 + $0x70] sm:$0xff]
      %v2423 = vld [vmem:[#allocation10 + $0x78] sm:$0xff]
      %v2424 = vadd.f32 %v2408, %v2318
      %v2425 = vadd.f32 %v2409, %v2320
      %v2426 = vadd.f32 %v2410, %v2322
      %v2427 = vadd.f32 %v2411, %v2324
      %v2428 = vadd.f32 %v2412, %v2328
      %v2429 = vadd.f32 %v2413, %v2330
      %v2430 = vadd.f32 %v2414, %v2332
      %v2431 = vadd.f32 %v2415, %v2334
      %v2432 = vadd.f32 %v2416, %v2338
      %v2433 = vadd.f32 %v2417, %v2340
      %v2434 = vadd.f32 %v2418, %v2342
      %v2435 = vadd.f32 %v2419, %v2344
      %v2436 = vadd.f32 %v2420, %v2348
      %v2437 = vadd.f32 %v2421, %v2350
      %v2438 = vadd.f32 %v2422, %v2352
      %v2439 = vadd.f32 %v2423, %v2354
      %2440 = vst [vmem:[#allocation10] sm:$0xff] %v2424
      %2441 = vst [vmem:[#allocation10 + $0x8] sm:$0xff] %v2425
      %2442 = vst [vmem:[#allocation10 + $0x10] sm:$0xff] %v2426
      %2443 = vst [vmem:[#allocation10 + $0x18] sm:$0xff] %v2427
      %2444 = vst [vmem:[#allocation10 + $0x20] sm:$0xff] %v2428
      %2445 = vst [vmem:[#allocation10 + $0x28] sm:$0xff] %v2429
      %2446 = vst [vmem:[#allocation10 + $0x30] sm:$0xff] %v2430
      %2447 = vst [vmem:[#allocation10 + $0x38] sm:$0xff] %v2431
      %2448 = vst [vmem:[#allocation10 + $0x40] sm:$0xff] %v2432
      %2449 = vst [vmem:[#allocation10 + $0x48] sm:$0xff] %v2433
      %2450 = vst [vmem:[#allocation10 + $0x50] sm:$0xff] %v2434
      %2451 = vst [vmem:[#allocation10 + $0x58] sm:$0xff] %v2435
      %2452 = vst [vmem:[#allocation10 + $0x60] sm:$0xff] %v2436
      %2453 = vst [vmem:[#allocation10 + $0x68] sm:$0xff] %v2437
      %2454 = vst [vmem:[#allocation10 + $0x70] sm:$0xff] %v2438
      %2455 = vst [vmem:[#allocation10 + $0x78] sm:$0xff] %v2439
    $region45: #{tpu_custom_call.1} parent=1 // pred_fallthru
      _
    // Predicated region
    $region46: #{tpu_custom_call.1} parent=1 // pred_check
      _
    $region47: #{tpu_custom_call.1} parent=1 // pred_check_branch
      %2457 = sbr.rel (0) target = $region49
    $region48: #{tpu_custom_call.1} parent=1 // pred_region
      %s2459 = ssub.s32 2048, 2048
      %2460 = vsyncadd [#allocation4], %s2459
      %s2461 = sshll.u32 [#allocation10], 4
      %s2462 = int_to_ptr.vmem [resolvable:$true] %s2461
      %2467 = dma.vmem_to_hbm [thread:$0]  %s2462, 2048, %s5, [#allocation4], 256, 256, 16
    $region49: #{tpu_custom_call.1} parent=1 // pred_fallthru
      _
    // Predicated region
    $region50: #{tpu_custom_call.1} parent=1 // pred_check
      _
    $region51: #{tpu_custom_call.1} parent=1 // pred_check_branch
      %2469 = sbr.rel (0) target = $region53
    $region52: #{tpu_custom_call.1} parent=1 // pred_region
      %2470 = dma.done [#allocation4], 2048
    $region53: #{tpu_custom_call.1} parent=1 // pred_fallthru
      _
    %2471 = vsyncpa [#allocation3], 1
    %2472 = vsyncpa [#allocation6], 1
    %2473 = vsyncpa [#allocation9], 1
    %2474 = vsyncpa [#allocation4], 1

</llo_original>
